<compile_context>
chip_gen: v7x
topology: tpu7x:2x2x1
jax: 0.10.0
libtpu: 0.0.40
codegen_flags: <defaults>
</compile_context>

<pallas_src>
import functools

import jax
import jax.numpy as jnp
from jax import lax
from jax.experimental import pallas as pl
from jax.experimental.pallas import tpu as pltpu


def pointnet_kernel(x_ref, w1_ref, b1_ref, w2_ref, b2_ref, w3_ref, b3_ref,
                    wp_ref, bp_ref, out_ref, acc_ref, *,
                    batch_tile, point_tile, n_points, mask_points):
    k = pl.program_id(1)

    # ---- init the running per-batch max at the first point tile -----------
    @pl.when(k == 0)
    def _():
        acc_ref[...] = jnp.full_like(acc_ref, -jnp.inf)

    # x_ref: (batch_tile, point_tile, 3) float32.
    x = x_ref[...]

    # ---- Layer 1 (3 -> 64) on the VPU ------------------------------------
    # A K=3 MXU contraction is padded to 128/256 (~1-2% utilization); three
    # broadcast multiply-adds on the VALU are effectively free instead.
    w1 = w1_ref[...]                                         # (3, 64) f32
    h = (x[..., 0:1] * w1[0:1, :]
         + x[..., 1:2] * w1[1:2, :]
         + x[..., 2:3] * w1[2:3, :]
         + b1_ref[...])                                      # (bt, pt, 64)
    h = jnp.maximum(h, 0.0)

    rows = batch_tile * point_tile                           # M for the MXU dots
    h = h.reshape(rows, h.shape[-1])

    # ---- Layers 2 & 3 (64 -> 128 -> 256) on the MXU, bf16 in / f32 acc ----
    h = jnp.dot(h.astype(jnp.bfloat16), w2_ref[...],
                preferred_element_type=jnp.float32) + b2_ref[...]
    h = jnp.maximum(h, 0.0)
    h = jnp.dot(h.astype(jnp.bfloat16), w3_ref[...],
                preferred_element_type=jnp.float32) + b3_ref[...]
    h = jnp.maximum(h, 0.0)                                  # (rows, 256)

    c3 = h.shape[-1]
    h = h.reshape(batch_tile, point_tile, c3)

    # ---- mask padded points of a partial last tile to -inf ----------------
    if mask_points:
        point_base = k * point_tile
        pidx = lax.broadcasted_iota(jnp.int32, (batch_tile, point_tile, c3), 1)
        h = jnp.where(point_base + pidx < n_points, h, -jnp.inf)

    # ---- running torch.max(x, 1)[0] over the points axis ------------------
    acc_ref[...] = jnp.maximum(acc_ref[...], jnp.max(h, axis=1))   # (bt, 256)

    # ---- final_projection (256 -> 1024), once per batch tile ---------------
    @pl.when(k == pl.num_programs(1) - 1)
    def _():
        g = acc_ref[...]
        out_ref[...] = (jnp.dot(g.astype(jnp.bfloat16), wp_ref[...],
                                preferred_element_type=jnp.float32)
                        + bp_ref[...])


def _choose_tiles(B, N, target_rows):
    """Pick (batch_tile, point_tile) respecting the (8,128) block rules."""
    # Output block (batch_tile, out_channels): second-minor dim must be a
    # multiple of 8 or the full batch dim.
    if B > 8 and B % 8 == 0:
        batch_tile = 8
    else:
        batch_tile = B
    # Point tile: multiple of 8 (x-block sublane rule) or the full N.
    max_pt = max(8, target_rows // batch_tile)
    if N <= max_pt:
        if N % 8 == 0 or N < 8:
            point_tile = N
        else:
            point_tile = max(8, (N // 8) * 8)   # remainder handled by masking
    else:
        point_tile = max(8, (max_pt // 8) * 8)
    return batch_tile, point_tile


def _vmem_limit_bytes(batch_tile, point_tile, c1, c2, c3, c_out):
    """Scoped-VMEM request from the actual tile footprint, with headroom."""
    rows = batch_tile * point_tile
    x_block = batch_tile * point_tile * 128 * 4              # 3 lanes padded to 128
    weights = ((3 * c1 + c1 + c2 + c3 + c_out) * 4           # f32 W1 + biases
               + (c1 * c2 + c2 * c3 + c3 * c_out) * 2)       # bf16 MXU weights
    out_block = batch_tile * c_out * 4
    scratch = batch_tile * c3 * 4
    h_tmp = rows * (c1 + c2 + c3) * 4                        # layer intermediates
    total = 2 * x_block + 2 * weights + 2 * out_block + scratch + h_tmp
    return int(max(32 << 20, min(2 * total + (8 << 20), 64 << 20)))


def pointnet_encoder_xyz(x, params, *, batch_tile=None, point_tile=None,
                         target_rows=4096):
    """x: (B, N, 3) float32, params: dict of f32 weights/biases.

    Returns (B, out_channels) float32.
    """
    B, N, C_in = x.shape
    assert C_in == 3, "PointNetEncoderXYZ only supports 3 channels"

    auto_bt, auto_pt = _choose_tiles(B, N, target_rows)
    if batch_tile is None:
        batch_tile = auto_bt
    if point_tile is None:
        point_tile = auto_pt
    assert B % batch_tile == 0, (B, batch_tile)
    assert batch_tile % 8 == 0 or batch_tile == B, (
        "batch_tile must be a multiple of 8 or the full batch (8,128 rule)")
    assert point_tile % 8 == 0 or point_tile == N, (
        "point_tile must be a multiple of 8 or the full points dim")

    num_batch_tiles = B // batch_tile
    num_point_tiles = pl.cdiv(N, point_tile)
    mask_points = (N % point_tile) != 0

    # Weight dtypes: layer-1 stays f32 (VPU path); MXU operands go bf16,
    # biases stay f32 (added to the f32 accumulator).
    w1 = params["w1"].astype(jnp.float32)
    b1 = params["b1"].astype(jnp.float32)
    w2 = params["w2"].astype(jnp.bfloat16)
    b2 = params["b2"].astype(jnp.float32)
    w3 = params["w3"].astype(jnp.bfloat16)
    b3 = params["b3"].astype(jnp.float32)
    wp = params["wp"].astype(jnp.bfloat16)
    bp = params["bp"].astype(jnp.float32)
    c1, c2, c3 = w1.shape[1], w2.shape[1], w3.shape[1]
    out_channels = wp.shape[1]

    flops = 2 * B * N * (C_in * c1 + c1 * c2 + c2 * c3) + 2 * B * c3 * out_channels
    bytes_accessed = (
        x.size * x.dtype.itemsize
        + sum(a.size * a.dtype.itemsize for a in (w1, b1, w2, b2, w3, b3, wp, bp))
        + B * out_channels * 4)

    kernel = functools.partial(
        pointnet_kernel,
        batch_tile=batch_tile, point_tile=point_tile,
        n_points=N, mask_points=mask_points)

    grid_spec = pltpu.PrefetchScalarGridSpec(
        num_scalar_prefetch=0,
        grid=(num_batch_tiles, num_point_tiles),
        in_specs=[
            pl.BlockSpec((batch_tile, point_tile, C_in),
                         lambda i, k: (i, k, 0)),                   # x tile
            pl.BlockSpec(w1.shape, lambda i, k: (0, 0)),            # W1
            pl.BlockSpec(b1.shape, lambda i, k: (0, 0)),            # b1
            pl.BlockSpec(w2.shape, lambda i, k: (0, 0)),            # W2
            pl.BlockSpec(b2.shape, lambda i, k: (0, 0)),            # b2
            pl.BlockSpec(w3.shape, lambda i, k: (0, 0)),            # W3
            pl.BlockSpec(b3.shape, lambda i, k: (0, 0)),            # b3
            pl.BlockSpec(wp.shape, lambda i, k: (0, 0)),            # Wp
            pl.BlockSpec(bp.shape, lambda i, k: (0, 0)),            # bp
        ],
        out_specs=pl.BlockSpec((batch_tile, out_channels),
                               lambda i, k: (i, 0)),
        scratch_shapes=[pltpu.VMEM((batch_tile, c3), jnp.float32)],  # running max
    )

    return pl.pallas_call(
        kernel,
        out_shape=jax.ShapeDtypeStruct((B, out_channels), jnp.float32),
        grid_spec=grid_spec,
        compiler_params=pltpu.CompilerParams(
            dimension_semantics=("parallel", "arbitrary"),
            vmem_limit_bytes=_vmem_limit_bytes(
                batch_tile, point_tile, c1, c2, c3, out_channels)),
        cost_estimate=pl.CostEstimate(flops=flops, transcendentals=0,
                                      bytes_accessed=bytes_accessed),
    )(x, w1, b1, w2, b2, w3, b3, wp, bp)


def init_params(key, in_channels=3, out_channels=1024):
    """Deterministic init mimicking PyTorch nn.Linear default (uniform +-1/sqrt(fan_in))."""
    block_channel = [64, 128, 256]
    dims = [(in_channels, block_channel[0]),
            (block_channel[0], block_channel[1]),
            (block_channel[1], block_channel[2]),
            (block_channel[2], out_channels)]
    names = ["1", "2", "3", "p"]
    params = {}
    for name, (fan_in, fan_out) in zip(names, dims):
        key, kw, kb = jax.random.split(key, 3)
        bound = 1.0 / (fan_in ** 0.5)
        params["w" + name] = jax.random.uniform(
            kw, (fan_in, fan_out), jnp.float32, -bound, bound)
        params["b" + name] = jax.random.uniform(
            kb, (1, fan_out), jnp.float32, -bound, bound)
    return params


def reference_forward(x, params):
    """Pure f32 reference matching the PyTorch module semantics."""
    h = jnp.maximum(x @ params["w1"] + params["b1"], 0.0)
    h = jnp.maximum(h @ params["w2"] + params["b2"], 0.0)
    h = jnp.maximum(h @ params["w3"] + params["b3"], 0.0)
    g = jnp.max(h, axis=1)
    return g @ params["wp"] + params["bp"]


if __name__ == "__main__":
    key = jax.random.PRNGKey(0)
    key, kx1, kx2 = jax.random.split(key, 3)

    B, C_in, C_out = 2, 3, 1024
    params = init_params(key, in_channels=C_in, out_channels=C_out)

    # Case 1: points axis tiled into 3 reduction steps (running-max scratch).
    N1 = 384
    x1 = jax.random.normal(kx1, (B, N1, C_in), dtype=jnp.float32)
    out1 = jax.block_until_ready(
        pointnet_encoder_xyz(x1, params, point_tile=128))
    ref1 = reference_forward(x1, params)
    assert out1.shape == (B, C_out), out1.shape
    # bf16 MXU inputs (f32 accumulation) -> loosened tolerance vs the f32 reference.
    assert jnp.allclose(out1, ref1, atol=1e-1, rtol=5e-2), \
        float(jnp.max(jnp.abs(out1 - ref1)))

    # Case 2: N not a multiple of point_tile -> padded rows masked to -inf.
    N2 = 200
    x2 = jax.random.normal(kx2, (B, N2, C_in), dtype=jnp.float32)
    out2 = jax.block_until_ready(
        pointnet_encoder_xyz(x2, params, point_tile=128))
    ref2 = reference_forward(x2, params)
    assert out2.shape == (B, C_out), out2.shape
    assert jnp.allclose(out2, ref2, atol=1e-1, rtol=5e-2), \
        float(jnp.max(jnp.abs(out2 - ref2)))

    print("KERNEL_OK")
</pallas_src>

<mosaic_0001>
module attributes {stable_mosaic.version = 11 : i64} {
  func.func @pointnet_kernel(%arg0: i32, %arg1: i32, %arg2: memref<2x128x3xf32, #tpu.memory_space<vmem>>, %arg3: memref<3x64xf32, #tpu.memory_space<vmem>>, %arg4: memref<1x64xf32, #tpu.memory_space<vmem>>, %arg5: memref<64x128xbf16, #tpu.memory_space<vmem>>, %arg6: memref<1x128xf32, #tpu.memory_space<vmem>>, %arg7: memref<128x256xbf16, #tpu.memory_space<vmem>>, %arg8: memref<1x256xf32, #tpu.memory_space<vmem>>, %arg9: memref<256x1024xbf16, #tpu.memory_space<vmem>>, %arg10: memref<1x1024xf32, #tpu.memory_space<vmem>>, %arg11: memref<2x1024xf32, #tpu.memory_space<vmem>>, %arg12: memref<2x256xf32, #tpu.memory_space<vmem>>) attributes {dimension_semantics = [#tpu.dimension_semantics<parallel>, #tpu.dimension_semantics<arbitrary>], iteration_bounds = array<i64: 1, 3>, scalar_prefetch = 0 : i64, scratch_operands = 1 : i64, tpu.core_type = #tpu.core_type<tc>, window_params = [{transform_indices = @transform_0, window_bounds = array<i64: 2, 128, 3>}, {pipeline_mode = #tpu.pipeline_mode<synchronous>, transform_indices = @transform_1, window_bounds = array<i64: 3, 64>}, {pipeline_mode = #tpu.pipeline_mode<synchronous>, transform_indices = @transform_2, window_bounds = array<i64: 1, 64>}, {pipeline_mode = #tpu.pipeline_mode<synchronous>, transform_indices = @transform_3, window_bounds = array<i64: 64, 128>}, {pipeline_mode = #tpu.pipeline_mode<synchronous>, transform_indices = @transform_4, window_bounds = array<i64: 1, 128>}, {pipeline_mode = #tpu.pipeline_mode<synchronous>, transform_indices = @transform_5, window_bounds = array<i64: 128, 256>}, {pipeline_mode = #tpu.pipeline_mode<synchronous>, transform_indices = @transform_6, window_bounds = array<i64: 1, 256>}, {pipeline_mode = #tpu.pipeline_mode<synchronous>, transform_indices = @transform_7, window_bounds = array<i64: 256, 1024>}, {pipeline_mode = #tpu.pipeline_mode<synchronous>, transform_indices = @transform_8, window_bounds = array<i64: 1, 1024>}, {transform_indices = @transform_9, window_bounds = array<i64: 2, 1024>}]} {
    %c0_i32 = arith.constant 0 : i32
    %0 = arith.cmpi eq, %arg1, %c0_i32 : i32
    %1 = arith.extui %0 : i1 to i32
    %c0_i32_0 = arith.constant 0 : i32
    %2 = arith.cmpi ne, %1, %c0_i32_0 : i32
    scf.if %2 {
      %cst_25 = arith.constant 0xFF800000 : f32
      %56 = vector.broadcast %cst_25 : f32 to vector<2x256xf32>
      %c0_26 = arith.constant 0 : index
      %c0_27 = arith.constant 0 : index
      %57 = vector.load %arg12[%c0_26, %c0_27] : memref<2x256xf32, #tpu.memory_space<vmem>>, vector<2x256xf32>
      tpu.vector_store %arg12[%c0_26, %c0_27], %56 {strides = array<i32>} : memref<2x256xf32, #tpu.memory_space<vmem>>, vector<2x256xf32>,
    } else {
    }
    %c0 = arith.constant 0 : index
    %c0_1 = arith.constant 0 : index
    %c0_2 = arith.constant 0 : index
    %3 = vector.load %arg2[%c0, %c0_1, %c0_2] : memref<2x128x3xf32, #tpu.memory_space<vmem>>, vector<2x128x3xf32>
    %c0_3 = arith.constant 0 : index
    %c0_4 = arith.constant 0 : index
    %4 = vector.load %arg3[%c0_3, %c0_4] : memref<3x64xf32, #tpu.memory_space<vmem>>, vector<3x64xf32>
    %5 = vector.extract_strided_slice %3 {offsets = [0, 0, 0], sizes = [2, 128, 1], strides = [1, 1, 1]} : vector<2x128x3xf32> to vector<2x128x1xf32>
    %6 = vector.extract_strided_slice %4 {offsets = [0, 0], sizes = [1, 64], strides = [1, 1]} : vector<3x64xf32> to vector<1x64xf32>
    %7 = vector.shape_cast %6 : vector<1x64xf32> to vector<1x1x64xf32>
    %8 = vector.broadcast %5 : vector<2x128x1xf32> to vector<2x128x64xf32>
    %9 = vector.broadcast %7 : vector<1x1x64xf32> to vector<2x128x64xf32>
    %10 = arith.mulf %8, %9 : vector<2x128x64xf32>
    %11 = vector.extract_strided_slice %3 {offsets = [0, 0, 1], sizes = [2, 128, 1], strides = [1, 1, 1]} : vector<2x128x3xf32> to vector<2x128x1xf32>
    %12 = vector.extract_strided_slice %4 {offsets = [1, 0], sizes = [1, 64], strides = [1, 1]} : vector<3x64xf32> to vector<1x64xf32>
    %13 = vector.shape_cast %12 : vector<1x64xf32> to vector<1x1x64xf32>
    %14 = vector.broadcast %11 : vector<2x128x1xf32> to vector<2x128x64xf32>
    %15 = vector.broadcast %13 : vector<1x1x64xf32> to vector<2x128x64xf32>
    %16 = arith.mulf %14, %15 : vector<2x128x64xf32>
    %17 = arith.addf %10, %16 : vector<2x128x64xf32>
    %18 = vector.extract_strided_slice %3 {offsets = [0, 0, 2], sizes = [2, 128, 1], strides = [1, 1, 1]} : vector<2x128x3xf32> to vector<2x128x1xf32>
    %19 = vector.extract_strided_slice %4 {offsets = [2, 0], sizes = [1, 64], strides = [1, 1]} : vector<3x64xf32> to vector<1x64xf32>
    %20 = vector.shape_cast %19 : vector<1x64xf32> to vector<1x1x64xf32>
    %21 = vector.broadcast %18 : vector<2x128x1xf32> to vector<2x128x64xf32>
    %22 = vector.broadcast %20 : vector<1x1x64xf32> to vector<2x128x64xf32>
    %23 = arith.mulf %21, %22 : vector<2x128x64xf32>
    %24 = arith.addf %17, %23 : vector<2x128x64xf32>
    %c0_5 = arith.constant 0 : index
    %c0_6 = arith.constant 0 : index
    %25 = vector.load %arg4[%c0_5, %c0_6] : memref<1x64xf32, #tpu.memory_space<vmem>>, vector<1x64xf32>
    %26 = vector.shape_cast %25 : vector<1x64xf32> to vector<1x1x64xf32>
    %27 = vector.broadcast %26 : vector<1x1x64xf32> to vector<2x128x64xf32>
    %28 = arith.addf %24, %27 : vector<2x128x64xf32>
    %cst = arith.constant 0.000000e+00 : f32
    %29 = vector.broadcast %cst : f32 to vector<2x128x64xf32>
    %30 = arith.maximumf %28, %29 : vector<2x128x64xf32>
    %31 = vector.shape_cast %30 : vector<2x128x64xf32> to vector<256x64xf32>
    %32 = arith.truncf %31 : vector<256x64xf32> to vector<256x64xbf16>
    %c0_7 = arith.constant 0 : index
    %c0_8 = arith.constant 0 : index
    %33 = vector.load %arg5[%c0_7, %c0_8] : memref<64x128xbf16, #tpu.memory_space<vmem>>, vector<64x128xbf16>
    %cst_9 = arith.constant dense<0.000000e+00> : vector<256x128xf32>
    %34 = tpu.matmul %32, %33, %cst_9 {dimension_numbers = #tpu.dot_dimension_numbers<[1], [0], [0], [1], [0, 0, 1, 1], [], []>} : vector<256x64xbf16>, vector<64x128xbf16>, vector<256x128xf32> -> vector<256x128xf32>
    %c0_10 = arith.constant 0 : index
    %c0_11 = arith.constant 0 : index
    %35 = vector.load %arg6[%c0_10, %c0_11] : memref<1x128xf32, #tpu.memory_space<vmem>>, vector<1x128xf32>
    %36 = vector.broadcast %35 : vector<1x128xf32> to vector<256x128xf32>
    %37 = arith.addf %34, %36 : vector<256x128xf32>
    %cst_12 = arith.constant 0.000000e+00 : f32
    %38 = vector.broadcast %cst_12 : f32 to vector<256x128xf32>
    %39 = arith.maximumf %37, %38 : vector<256x128xf32>
    %40 = arith.truncf %39 : vector<256x128xf32> to vector<256x128xbf16>
    %c0_13 = arith.constant 0 : index
    %c0_14 = arith.constant 0 : index
    %41 = vector.load %arg7[%c0_13, %c0_14] : memref<128x256xbf16, #tpu.memory_space<vmem>>, vector<128x256xbf16>
    %cst_15 = arith.constant dense<0.000000e+00> : vector<256x256xf32>
    %42 = tpu.matmul %40, %41, %cst_15 {dimension_numbers = #tpu.dot_dimension_numbers<[1], [0], [0], [1], [0, 0, 1, 1], [], []>} : vector<256x128xbf16>, vector<128x256xbf16>, vector<256x256xf32> -> vector<256x256xf32>
    %c0_16 = arith.constant 0 : index
    %c0_17 = arith.constant 0 : index
    %43 = vector.load %arg8[%c0_16, %c0_17] : memref<1x256xf32, #tpu.memory_space<vmem>>, vector<1x256xf32>
    %44 = vector.broadcast %43 : vector<1x256xf32> to vector<256x256xf32>
    %45 = arith.addf %42, %44 : vector<256x256xf32>
    %cst_18 = arith.constant 0.000000e+00 : f32
    %46 = vector.broadcast %cst_18 : f32 to vector<256x256xf32>
    %47 = arith.maximumf %45, %46 : vector<256x256xf32>
    %48 = vector.shape_cast %47 : vector<256x256xf32> to vector<2x128x256xf32>
    %c0_19 = arith.constant 0 : index
    %c0_20 = arith.constant 0 : index
    %49 = vector.load %arg12[%c0_19, %c0_20] : memref<2x256xf32, #tpu.memory_space<vmem>>, vector<2x256xf32>
    %cst_21 = arith.constant dense<0xFF800000> : vector<2x256xf32>
    %50 = vector.multi_reduction <maximumf>, %48, %cst_21 [1] : vector<2x128x256xf32> to vector<2x256xf32>
    %51 = arith.maximumf %49, %50 : vector<2x256xf32>
    %c0_22 = arith.constant 0 : index
    %c0_23 = arith.constant 0 : index
    %52 = vector.load %arg12[%c0_22, %c0_23] : memref<2x256xf32, #tpu.memory_space<vmem>>, vector<2x256xf32>
    tpu.vector_store %arg12[%c0_22, %c0_23], %51 {strides = array<i32>} : memref<2x256xf32, #tpu.memory_space<vmem>>, vector<2x256xf32>,
    %c2_i32 = arith.constant 2 : i32
    %53 = arith.cmpi eq, %arg1, %c2_i32 : i32
    %54 = arith.extui %53 : i1 to i32
    %c0_i32_24 = arith.constant 0 : i32
    %55 = arith.cmpi ne, %54, %c0_i32_24 : i32
    scf.if %55 {
      %c0_25 = arith.constant 0 : index
      %c0_26 = arith.constant 0 : index
      %56 = vector.load %arg12[%c0_25, %c0_26] : memref<2x256xf32, #tpu.memory_space<vmem>>, vector<2x256xf32>
      %57 = arith.truncf %56 : vector<2x256xf32> to vector<2x256xbf16>
      %c0_27 = arith.constant 0 : index
      %c0_28 = arith.constant 0 : index
      %58 = vector.load %arg9[%c0_27, %c0_28] : memref<256x1024xbf16, #tpu.memory_space<vmem>>, vector<256x1024xbf16>
      %cst_29 = arith.constant dense<0.000000e+00> : vector<2x1024xf32>
      %59 = tpu.matmul %57, %58, %cst_29 {dimension_numbers = #tpu.dot_dimension_numbers<[1], [0], [0], [1], [0, 0, 1, 1], [], []>} : vector<2x256xbf16>, vector<256x1024xbf16>, vector<2x1024xf32> -> vector<2x1024xf32>
      %c0_30 = arith.constant 0 : index
      %c0_31 = arith.constant 0 : index
      %60 = vector.load %arg10[%c0_30, %c0_31] : memref<1x1024xf32, #tpu.memory_space<vmem>>, vector<1x1024xf32>
      %61 = vector.broadcast %60 : vector<1x1024xf32> to vector<2x1024xf32>
      %62 = arith.addf %59, %61 : vector<2x1024xf32>
      %c0_32 = arith.constant 0 : index
      %c0_33 = arith.constant 0 : index
      %63 = vector.load %arg11[%c0_32, %c0_33] : memref<2x1024xf32, #tpu.memory_space<vmem>>, vector<2x1024xf32>
      tpu.vector_store %arg11[%c0_32, %c0_33], %62 {strides = array<i32>} : memref<2x1024xf32, #tpu.memory_space<vmem>>, vector<2x1024xf32>,
    } else {
    }
    return
  }
  func.func @transform_0(%arg0: i32, %arg1: i32) -> (i32, i32, i32) {
    %c0_i32 = arith.constant 0 : i32
    %c0_i32_0 = arith.constant 0 : i32
    return %arg0, %arg1, %c0_i32 : i32, i32, i32
  }
  func.func @transform_1(%arg0: i32, %arg1: i32) -> (i32, i32) {
    %c0_i32 = arith.constant 0 : i32
    %c0_i32_0 = arith.constant 0 : i32
    %c0_i32_1 = arith.constant 0 : i32
    return %c0_i32, %c0_i32_0 : i32, i32
  }
  func.func @transform_2(%arg0: i32, %arg1: i32) -> (i32, i32) {
    %c0_i32 = arith.constant 0 : i32
    %c0_i32_0 = arith.constant 0 : i32
    %c0_i32_1 = arith.constant 0 : i32
    return %c0_i32, %c0_i32_0 : i32, i32
  }
  func.func @transform_3(%arg0: i32, %arg1: i32) -> (i32, i32) {
    %c0_i32 = arith.constant 0 : i32
    %c0_i32_0 = arith.constant 0 : i32
    %c0_i32_1 = arith.constant 0 : i32
    return %c0_i32, %c0_i32_0 : i32, i32
  }
  func.func @transform_4(%arg0: i32, %arg1: i32) -> (i32, i32) {
    %c0_i32 = arith.constant 0 : i32
    %c0_i32_0 = arith.constant 0 : i32
    %c0_i32_1 = arith.constant 0 : i32
    return %c0_i32, %c0_i32_0 : i32, i32
  }
  func.func @transform_5(%arg0: i32, %arg1: i32) -> (i32, i32) {
    %c0_i32 = arith.constant 0 : i32
    %c0_i32_0 = arith.constant 0 : i32
    %c0_i32_1 = arith.constant 0 : i32
    return %c0_i32, %c0_i32_0 : i32, i32
  }
  func.func @transform_6(%arg0: i32, %arg1: i32) -> (i32, i32) {
    %c0_i32 = arith.constant 0 : i32
    %c0_i32_0 = arith.constant 0 : i32
    %c0_i32_1 = arith.constant 0 : i32
    return %c0_i32, %c0_i32_0 : i32, i32
  }
  func.func @transform_7(%arg0: i32, %arg1: i32) -> (i32, i32) {
    %c0_i32 = arith.constant 0 : i32
    %c0_i32_0 = arith.constant 0 : i32
    %c0_i32_1 = arith.constant 0 : i32
    return %c0_i32, %c0_i32_0 : i32, i32
  }
  func.func @transform_8(%arg0: i32, %arg1: i32) -> (i32, i32) {
    %c0_i32 = arith.constant 0 : i32
    %c0_i32_0 = arith.constant 0 : i32
    %c0_i32_1 = arith.constant 0 : i32
    return %c0_i32, %c0_i32_0 : i32, i32
  }
  func.func @transform_9(%arg0: i32, %arg1: i32) -> (i32, i32) {
    %c0_i32 = arith.constant 0 : i32
    %c0_i32_0 = arith.constant 0 : i32
    return %arg0, %c0_i32 : i32, i32
  }
}

</mosaic_0001>

<llo_original>
// kernel: tpu_custom_call.1
$region0: #{tpu_custom_call.1}
  #allocation0 [shape = 'u32[]', space=smem, size = 0x4, offset = 0x4, fixed_abs, tag = 'smem constant byte address 0x4 - core index']
  #allocation1 [shape = 'u32[144,128]{1,0:T(1,128)}', space=vmem, size = 0x12000, scoped, tag = 'internal scratch']
  #allocation2 [shape = 'f32[2,256]{1,0:T(2,128)}', space=vmem, size = 0x800, scoped, tag = 'scratch operand']
  %s0 = inlined_call_operand.vmem [shape: f32[2,384,3], index: 0, kind: input, shape index: {}]
  %s1 = inlined_call_operand.vmem [shape: f32[3,64], index: 1, kind: input, shape index: {}]
  %s2 = inlined_call_operand.vmem [shape: f32[1,64], index: 2, kind: input, shape index: {}]
  %s3 = inlined_call_operand.vmem [shape: bf16[64,128], index: 3, kind: input, shape index: {}]
  %s4 = inlined_call_operand.vmem [shape: f32[1,128], index: 4, kind: input, shape index: {}]
  %s5 = inlined_call_operand.vmem [shape: bf16[128,256], index: 5, kind: input, shape index: {}]
  %s6 = inlined_call_operand.vmem [shape: f32[1,256], index: 6, kind: input, shape index: {}]
  %s7 = inlined_call_operand.hbm [shape: bf16[256,1024], index: 7, kind: input, shape index: {}]
  %s8 = inlined_call_operand.vmem [shape: f32[1,1024], index: 8, kind: input, shape index: {}]
  %s9 = inlined_call_operand.hbm [shape: f32[2,1024], index: 9, kind: output, shape index: {}]
  %s10 = sld [smem:[#allocation0]]
  $region119: #{tpu_custom_call.1} parent=0
    _
  %s12 = ssub.s32 1, %s10
  %s13 = scalar_select 0, %s12, %s10
  $region1: #{tpu_custom_call.1} parent=0
    #allocation3 [shape = 'u8[262144]{0}', space=vmem, size = 0x40000, scoped, tag = 'input window, operand 0']
    #allocation4 [shape = 'u8[524288]{0}', space=vmem, size = 0x80000, scoped, tag = 'input window, operand 7, single buffered']
    #allocation5 [shape = 's32[2]{0}', space=sflag, size = 0x8, scoped, tag = 'scoped memory for tpu_custom_call.1']
    #allocation6 [shape = 's32[2]{0}', space=sflag, size = 0x8, scoped, tag = 'scoped memory for tpu_custom_call.1']
    #allocation7 [shape = 'u8[8192]{0}', space=vmem, size = 0x2000, scoped, tag = 'output window, operand 0, single buffered']
    %14 = vsyncpa [#allocation5], 0
    %15 = vsyncpa [#allocation6], 0
    loop: start=0, step=1, limit=5
    $region2: #{tpu_custom_call.1} parent=1 // loop_pre_header
      _
    $region3: #{tpu_custom_call.1} parent=1 // loop_header
      %s17 = sphi 0, %s21
      %p18 = scmp.ge.s32.totalorder %s17, 5
      %s24 = sphi 0, %s36
      %s25 = sphi 0, %s32
      %s26 = sphi 0, %s24
      %s27 = sphi 0, %s25
      %s28 = sphi 0, %s26
      %s29 = sphi 0, %s27
      %s41 = sphi 0, %s43
      %s44 = sphi 0, %s41
      %s45 = sphi 0, %s44
      %s61 = sphi 0, %s45
      %s65 = sphi 0, %s65
      %s67 = sphi 0, %s65
      %s68 = sphi 0, %s67
      %s82 = sphi 0, %s68
      %s86 = sphi 0, %s86
      %s88 = sphi 0, %s86
      %s89 = sphi 0, %s88
      %s103 = sphi 0, %s89
      %s107 = sphi 0, %s107
      %s109 = sphi 0, %s107
      %s110 = sphi 0, %s109
      %s124 = sphi 0, %s110
      %s128 = sphi 0, %s128
      %s130 = sphi 0, %s128
      %s131 = sphi 0, %s130
      %s145 = sphi 0, %s131
      %s149 = sphi 0, %s149
      %s151 = sphi 0, %s149
      %s152 = sphi 0, %s151
      %s166 = sphi 0, %s152
      %s170 = sphi 0, %s170
      %s172 = sphi 0, %s170
      %s173 = sphi 0, %s172
      %s187 = sphi 0, %s173
      %s191 = sphi 0, %s191
      %s193 = sphi 0, %s191
      %s194 = sphi 0, %s193
      %s208 = sphi 0, %s194
      %s212 = sphi 0, %s212
      %s214 = sphi 0, %s212
      %s215 = sphi 0, %s214
      %s229 = sphi 0, %s215
      %s235 = sphi 0, %s237
      %s238 = sphi 0, %s235
      %s239 = sphi 0, %s238
      %s255 = sphi 0, %s239
    $region4: #{tpu_custom_call.1} parent=1 // loop_header_branch
      %20 = sbr.rel (%p18) target = $region8
    $region5: #{tpu_custom_call.1} parent=1 // loop_body
      %s22 = ssub.s32 %s17, 1
      %s23 = ssub.s32 %s17, 2
      %s30 = sadd.s32 1, %s25
      %p31 = scmp.ge.s32.totalorder %s30, 3
      %s32 = scalar_select %p31, 0, %s30
      %s33 = sadd.s32 1, %s24
      %s34 = scalar_select %p31, %s33, %s24
      %p35 = scmp.ge.s32.totalorder %s34, 1
      %s36 = scalar_select %p35, 0, %s34
      %s37 = ssub.s32 %s24, %s36
      %s38 = ssub.s32 %s25, %s32
      %s39 = sor.u32 %s37, %s38
      %p40 = scmp.eq.s32.totalorder %s39, 0
      %s42 = sadd.s32 %s41, 1
      %s43 = scalar_select %p40, %s41, %s42
      %p46 = pneg %p40
      %p47 = scmp.eq.s32.totalorder %s17, 2
      %p48 = por %p46, %p47
      %p49 = scmp.ne.s32.totalorder %s41, %s44
      %p50 = scmp.eq.s32.totalorder %s17, 0
      %p51 = por %p49, %p50
      %p52 = scmp.ne.s32.totalorder %s41, %s44
      %p53 = scmp.eq.s32.totalorder %s22, 2
      %p54 = por %p52, %p53
      %p55 = scmp.ne.s32.totalorder %s44, %s45
      %p56 = scmp.eq.s32.totalorder %s22, 0
      %p57 = por %p55, %p56
      %p58 = scmp.ne.s32.totalorder %s44, %s45
      %p59 = scmp.eq.s32.totalorder %s23, 2
      %p60 = por %p58, %p59
      %p62 = scmp.ne.s32.totalorder %s45, %s61
      %p63 = scmp.eq.s32.totalorder %s23, 0
      %p64 = por %p62, %p63
      %s66 = sadd.s32 %s65, 1
      %p69 = scmp.eq.s32.totalorder %s17, 2
      %p70 = scmp.ne.s32.totalorder %s65, %s67
      %p71 = scmp.eq.s32.totalorder %s17, 0
      %p72 = por %p70, %p71
      %p73 = scmp.ne.s32.totalorder %s65, %s67
      %p74 = scmp.eq.s32.totalorder %s22, 2
      %p75 = por %p73, %p74
      %p76 = scmp.ne.s32.totalorder %s67, %s68
      %p77 = scmp.eq.s32.totalorder %s22, 0
      %p78 = por %p76, %p77
      %p79 = scmp.ne.s32.totalorder %s67, %s68
      %p80 = scmp.eq.s32.totalorder %s23, 2
      %p81 = por %p79, %p80
      %p83 = scmp.ne.s32.totalorder %s68, %s82
      %p84 = scmp.eq.s32.totalorder %s23, 0
      %p85 = por %p83, %p84
      %s87 = sadd.s32 %s86, 1
      %p90 = scmp.eq.s32.totalorder %s17, 2
      %p91 = scmp.ne.s32.totalorder %s86, %s88
      %p92 = scmp.eq.s32.totalorder %s17, 0
      %p93 = por %p91, %p92
      %p94 = scmp.ne.s32.totalorder %s86, %s88
      %p95 = scmp.eq.s32.totalorder %s22, 2
      %p96 = por %p94, %p95
      %p97 = scmp.ne.s32.totalorder %s88, %s89
      %p98 = scmp.eq.s32.totalorder %s22, 0
      %p99 = por %p97, %p98
      %p100 = scmp.ne.s32.totalorder %s88, %s89
      %p101 = scmp.eq.s32.totalorder %s23, 2
      %p102 = por %p100, %p101
      %p104 = scmp.ne.s32.totalorder %s89, %s103
      %p105 = scmp.eq.s32.totalorder %s23, 0
      %p106 = por %p104, %p105
      %s108 = sadd.s32 %s107, 1
      %p111 = scmp.eq.s32.totalorder %s17, 2
      %p112 = scmp.ne.s32.totalorder %s107, %s109
      %p113 = scmp.eq.s32.totalorder %s17, 0
      %p114 = por %p112, %p113
      %p115 = scmp.ne.s32.totalorder %s107, %s109
      %p116 = scmp.eq.s32.totalorder %s22, 2
      %p117 = por %p115, %p116
      %p118 = scmp.ne.s32.totalorder %s109, %s110
      %p119 = scmp.eq.s32.totalorder %s22, 0
      %p120 = por %p118, %p119
      %p121 = scmp.ne.s32.totalorder %s109, %s110
      %p122 = scmp.eq.s32.totalorder %s23, 2
      %p123 = por %p121, %p122
      %p125 = scmp.ne.s32.totalorder %s110, %s124
      %p126 = scmp.eq.s32.totalorder %s23, 0
      %p127 = por %p125, %p126
      %s129 = sadd.s32 %s128, 1
      %p132 = scmp.eq.s32.totalorder %s17, 2
      %p133 = scmp.ne.s32.totalorder %s128, %s130
      %p134 = scmp.eq.s32.totalorder %s17, 0
      %p135 = por %p133, %p134
      %p136 = scmp.ne.s32.totalorder %s128, %s130
      %p137 = scmp.eq.s32.totalorder %s22, 2
      %p138 = por %p136, %p137
      %p139 = scmp.ne.s32.totalorder %s130, %s131
      %p140 = scmp.eq.s32.totalorder %s22, 0
      %p141 = por %p139, %p140
      %p142 = scmp.ne.s32.totalorder %s130, %s131
      %p143 = scmp.eq.s32.totalorder %s23, 2
      %p144 = por %p142, %p143
      %p146 = scmp.ne.s32.totalorder %s131, %s145
      %p147 = scmp.eq.s32.totalorder %s23, 0
      %p148 = por %p146, %p147
      %s150 = sadd.s32 %s149, 1
      %p153 = scmp.eq.s32.totalorder %s17, 2
      %p154 = scmp.ne.s32.totalorder %s149, %s151
      %p155 = scmp.eq.s32.totalorder %s17, 0
      %p156 = por %p154, %p155
      %p157 = scmp.ne.s32.totalorder %s149, %s151
      %p158 = scmp.eq.s32.totalorder %s22, 2
      %p159 = por %p157, %p158
      %p160 = scmp.ne.s32.totalorder %s151, %s152
      %p161 = scmp.eq.s32.totalorder %s22, 0
      %p162 = por %p160, %p161
      %p163 = scmp.ne.s32.totalorder %s151, %s152
      %p164 = scmp.eq.s32.totalorder %s23, 2
      %p165 = por %p163, %p164
      %p167 = scmp.ne.s32.totalorder %s152, %s166
      %p168 = scmp.eq.s32.totalorder %s23, 0
      %p169 = por %p167, %p168
      %s171 = sadd.s32 %s170, 1
      %p174 = scmp.eq.s32.totalorder %s17, 2
      %p175 = scmp.ne.s32.totalorder %s170, %s172
      %p176 = scmp.eq.s32.totalorder %s17, 0
      %p177 = por %p175, %p176
      %p178 = scmp.ne.s32.totalorder %s170, %s172
      %p179 = scmp.eq.s32.totalorder %s22, 2
      %p180 = por %p178, %p179
      %p181 = scmp.ne.s32.totalorder %s172, %s173
      %p182 = scmp.eq.s32.totalorder %s22, 0
      %p183 = por %p181, %p182
      %p184 = scmp.ne.s32.totalorder %s172, %s173
      %p185 = scmp.eq.s32.totalorder %s23, 2
      %p186 = por %p184, %p185
      %p188 = scmp.ne.s32.totalorder %s173, %s187
      %p189 = scmp.eq.s32.totalorder %s23, 0
      %p190 = por %p188, %p189
      %s192 = sadd.s32 %s191, 1
      %p195 = scmp.eq.s32.totalorder %s17, 2
      %p196 = scmp.ne.s32.totalorder %s191, %s193
      %p197 = scmp.eq.s32.totalorder %s17, 0
      %p198 = por %p196, %p197
      %p199 = scmp.ne.s32.totalorder %s191, %s193
      %p200 = scmp.eq.s32.totalorder %s22, 2
      %p201 = por %p199, %p200
      %p202 = scmp.ne.s32.totalorder %s193, %s194
      %p203 = scmp.eq.s32.totalorder %s22, 0
      %p204 = por %p202, %p203
      %p205 = scmp.ne.s32.totalorder %s193, %s194
      %p206 = scmp.eq.s32.totalorder %s23, 2
      %p207 = por %p205, %p206
      %p209 = scmp.ne.s32.totalorder %s194, %s208
      %p210 = scmp.eq.s32.totalorder %s23, 0
      %p211 = por %p209, %p210
      %s213 = sadd.s32 %s212, 1
      %p216 = scmp.eq.s32.totalorder %s17, 2
      %p217 = scmp.ne.s32.totalorder %s212, %s214
      %p218 = scmp.eq.s32.totalorder %s17, 0
      %p219 = por %p217, %p218
      %p220 = scmp.ne.s32.totalorder %s212, %s214
      %p221 = scmp.eq.s32.totalorder %s22, 2
      %p222 = por %p220, %p221
      %p223 = scmp.ne.s32.totalorder %s214, %s215
      %p224 = scmp.eq.s32.totalorder %s22, 0
      %p225 = por %p223, %p224
      %p226 = scmp.ne.s32.totalorder %s214, %s215
      %p227 = scmp.eq.s32.totalorder %s23, 2
      %p228 = por %p226, %p227
      %p230 = scmp.ne.s32.totalorder %s215, %s229
      %p231 = scmp.eq.s32.totalorder %s23, 0
      %p232 = por %p230, %p231
      %s233 = ssub.s32 %s24, %s36
      %p234 = scmp.eq.s32.totalorder %s233, 0
      %s236 = sadd.s32 %s235, 1
      %s237 = scalar_select %p234, %s235, %s236
      %p240 = pneg %p234
      %p241 = scmp.eq.s32.totalorder %s17, 2
      %p242 = por %p240, %p241
      %p243 = scmp.ne.s32.totalorder %s235, %s238
      %p244 = scmp.eq.s32.totalorder %s17, 0
      %p245 = por %p243, %p244
      %p246 = scmp.ne.s32.totalorder %s235, %s238
      %p247 = scmp.eq.s32.totalorder %s22, 2
      %p248 = por %p246, %p247
      %p249 = scmp.ne.s32.totalorder %s238, %s239
      %p250 = scmp.eq.s32.totalorder %s22, 0
      %p251 = por %p249, %p250
      %p252 = scmp.ne.s32.totalorder %s238, %s239
      %p253 = scmp.eq.s32.totalorder %s23, 2
      %p254 = por %p252, %p253
      %p256 = scmp.ne.s32.totalorder %s239, %s255
      %p257 = scmp.eq.s32.totalorder %s23, 0
      %p258 = por %p256, %p257
      %p259 = scmp.le.s32.totalorder 1, %s17
      %p260 = scmp.lt.s32.totalorder %s17, 4
      %p261 = pnand %p259, %p260
      %p262 = pneg %p261
      // Predicated region
      $region9: #{tpu_custom_call.1} parent=5 // pred_check
        _
      $region10: #{tpu_custom_call.1} parent=5 // pred_check_branch
        %264 = sbr.rel (%p261) target = $region12
      $region11: #{tpu_custom_call.1} parent=5 // pred_region
        %s265 = ssub.s32 %s17, 1
        // Predicated region
        $region13: #{tpu_custom_call.1} parent=11 // pred_check
          %p266 = pneg %p78
        $region14: #{tpu_custom_call.1} parent=11 // pred_check_branch
          %268 = sbr.rel (%p266) target = $region16
        $region15: #{tpu_custom_call.1} parent=11 // pred_region
          _
        $region16: #{tpu_custom_call.1} parent=11 // pred_fallthru
          _
        // Predicated region
        $region17: #{tpu_custom_call.1} parent=11 // pred_check
          %p269 = pneg %p99
        $region18: #{tpu_custom_call.1} parent=11 // pred_check_branch
          %271 = sbr.rel (%p269) target = $region20
        $region19: #{tpu_custom_call.1} parent=11 // pred_region
          _
        $region20: #{tpu_custom_call.1} parent=11 // pred_fallthru
          _
        // Predicated region
        $region21: #{tpu_custom_call.1} parent=11 // pred_check
          %p272 = pneg %p120
        $region22: #{tpu_custom_call.1} parent=11 // pred_check_branch
          %274 = sbr.rel (%p272) target = $region24
        $region23: #{tpu_custom_call.1} parent=11 // pred_region
          _
        $region24: #{tpu_custom_call.1} parent=11 // pred_fallthru
          _
        // Predicated region
        $region25: #{tpu_custom_call.1} parent=11 // pred_check
          %p275 = pneg %p141
        $region26: #{tpu_custom_call.1} parent=11 // pred_check_branch
          %277 = sbr.rel (%p275) target = $region28
        $region27: #{tpu_custom_call.1} parent=11 // pred_region
          _
        $region28: #{tpu_custom_call.1} parent=11 // pred_fallthru
          _
        // Predicated region
        $region29: #{tpu_custom_call.1} parent=11 // pred_check
          %p278 = pneg %p162
        $region30: #{tpu_custom_call.1} parent=11 // pred_check_branch
          %280 = sbr.rel (%p278) target = $region32
        $region31: #{tpu_custom_call.1} parent=11 // pred_region
          _
        $region32: #{tpu_custom_call.1} parent=11 // pred_fallthru
          _
        // Predicated region
        $region33: #{tpu_custom_call.1} parent=11 // pred_check
          %p281 = pneg %p183
        $region34: #{tpu_custom_call.1} parent=11 // pred_check_branch
          %283 = sbr.rel (%p281) target = $region36
        $region35: #{tpu_custom_call.1} parent=11 // pred_region
          _
        $region36: #{tpu_custom_call.1} parent=11 // pred_fallthru
          _
        // Predicated region
        $region37: #{tpu_custom_call.1} parent=11 // pred_check
          %p284 = pneg %p204
        $region38: #{tpu_custom_call.1} parent=11 // pred_check_branch
          %286 = sbr.rel (%p284) target = $region40
        $region39: #{tpu_custom_call.1} parent=11 // pred_region
          %s288 = ssub.s32 16384, 16384
          %289 = vsyncadd [#allocation5], %s288
          %s290 = sshll.u32 [#allocation4], 4
          %s291 = int_to_ptr.vmem [resolvable:$true] %s290
          %296 = dma.hbm_to_vmem [thread:$0]  %s7, 16384, %s291, [#allocation5], 512, 512, 32
        $region40: #{tpu_custom_call.1} parent=11 // pred_fallthru
          _
        // Predicated region
        $region41: #{tpu_custom_call.1} parent=11 // pred_check
          %p297 = pneg %p225
        $region42: #{tpu_custom_call.1} parent=11 // pred_check_branch
          %299 = sbr.rel (%p297) target = $region44
        $region43: #{tpu_custom_call.1} parent=11 // pred_region
          _
        $region44: #{tpu_custom_call.1} parent=11 // pred_fallthru
          _
      $region12: #{tpu_custom_call.1} parent=5 // pred_fallthru
        _
      %p300 = scmp.lt.s32.totalorder %s17, 3
      // Predicated region
      $region45: #{tpu_custom_call.1} parent=5 // pred_check
        %p301 = pneg %p300
      $region46: #{tpu_custom_call.1} parent=5 // pred_check_branch
        %303 = sbr.rel (%p301) target = $region48
      $region47: #{tpu_custom_call.1} parent=5 // pred_region
        // Predicated region
        $region49: #{tpu_custom_call.1} parent=47 // pred_check
          %p304 = pneg %p51
        $region50: #{tpu_custom_call.1} parent=47 // pred_check_branch
          %306 = sbr.rel (%p304) target = $region52
        $region51: #{tpu_custom_call.1} parent=47 // pred_region
          %s307 = sand.u32 %s41, 1
          %s308 = sand.u32 %s41, 1
          %s309 = smul.addr %s308, 256
          %s310 = scalar_lea.vmem [#allocation3], %s309
          %s311 = smul.u32 2, %s24
          %s312 = smul.u32 16, %s25
          %s313 = smul.addr %s311, 48
          %s314 = sadd.s32 %s312, %s313
          %s315 = smul.addr %s314, 8
          %s316 = scalar_lea.vmem %s0, %s315
          // Predicated region
          $region53: #{tpu_custom_call.1} parent=51 // pred_check
            _
          $region54: #{tpu_custom_call.1} parent=51 // pred_check_branch
            %318 = sbr.rel (0) target = $region56
          $region55: #{tpu_custom_call.1} parent=51 // pred_region
            // Predicated region
            $region57: #{tpu_custom_call.1} parent=55 // pred_check
              _
            $region58: #{tpu_custom_call.1} parent=55 // pred_check_branch
              %320 = sbr.rel (0) target = $region60
            $region59: #{tpu_custom_call.1} parent=55 // pred_region
              // Predicated region
              $region72: #{tpu_custom_call.1} parent=59 // pred_check
                _
              $region73: #{tpu_custom_call.1} parent=59 // pred_check_branch
                %397 = sbr.rel (0) target = $region75
              $region74: #{tpu_custom_call.1} parent=59 // pred_region
                loop: start=0, step=1, limit=1
                $region76: #{tpu_custom_call.1} parent=74 // loop_pre_header
                  _
                $region77: #{tpu_custom_call.1} parent=74 // loop_header
                  %s399 = sphi 0, %s403
                  %p400 = scmp.ge.s32.totalorder %s399, 1
                  %s404 = sphi %s316, %s316
                  %s405 = sphi %s310, %s310
                $region78: #{tpu_custom_call.1} parent=74 // loop_header_branch
                  %402 = sbr.rel (%p400) target = $region82
                $region79: #{tpu_custom_call.1} parent=74 // loop_body
                  %v406 = vld [vmem:[%s404] sm:$0xff]
                  %407 = vst [vmem:[%s405] sm:$0xff] %v406
                  %v408 = vld [vmem:[%s404 + $0x8] sm:$0xff]
                  %409 = vst [vmem:[%s405 + $0x8] sm:$0xff] %v408
                  %v410 = vld [vmem:[%s404 + $0x10] sm:$0xff]
                  %411 = vst [vmem:[%s405 + $0x10] sm:$0xff] %v410
                  %v412 = vld [vmem:[%s404 + $0x18] sm:$0xff]
                  %413 = vst [vmem:[%s405 + $0x18] sm:$0xff] %v412
                  %v414 = vld [vmem:[%s404 + $0x20] sm:$0xff]
                  %415 = vst [vmem:[%s405 + $0x20] sm:$0xff] %v414
                  %v416 = vld [vmem:[%s404 + $0x28] sm:$0xff]
                  %417 = vst [vmem:[%s405 + $0x28] sm:$0xff] %v416
                  %v418 = vld [vmem:[%s404 + $0x30] sm:$0xff]
                  %419 = vst [vmem:[%s405 + $0x30] sm:$0xff] %v418
                  %v420 = vld [vmem:[%s404 + $0x38] sm:$0xff]
                  %421 = vst [vmem:[%s405 + $0x38] sm:$0xff] %v420
                  %v422 = vld [vmem:[%s404 + $0x40] sm:$0xff]
                  %423 = vst [vmem:[%s405 + $0x40] sm:$0xff] %v422
                  %v424 = vld [vmem:[%s404 + $0x48] sm:$0xff]
                  %425 = vst [vmem:[%s405 + $0x48] sm:$0xff] %v424
                  %v426 = vld [vmem:[%s404 + $0x50] sm:$0xff]
                  %427 = vst [vmem:[%s405 + $0x50] sm:$0xff] %v426
                  %v428 = vld [vmem:[%s404 + $0x58] sm:$0xff]
                  %429 = vst [vmem:[%s405 + $0x58] sm:$0xff] %v428
                  %v430 = vld [vmem:[%s404 + $0x60] sm:$0xff]
                  %431 = vst [vmem:[%s405 + $0x60] sm:$0xff] %v430
                  %v432 = vld [vmem:[%s404 + $0x68] sm:$0xff]
                  %433 = vst [vmem:[%s405 + $0x68] sm:$0xff] %v432
                  %v434 = vld [vmem:[%s404 + $0x70] sm:$0xff]
                  %435 = vst [vmem:[%s405 + $0x70] sm:$0xff] %v434
                  %v436 = vld [vmem:[%s404 + $0x78] sm:$0xff]
                  %437 = vst [vmem:[%s405 + $0x78] sm:$0xff] %v436
                  %v438 = vld [vmem:[%s404 + $0x180] sm:$0xff]
                  %439 = vst [vmem:[%s405 + $0x80] sm:$0xff] %v438
                  %v440 = vld [vmem:[%s404 + $0x188] sm:$0xff]
                  %441 = vst [vmem:[%s405 + $0x88] sm:$0xff] %v440
                  %v442 = vld [vmem:[%s404 + $0x190] sm:$0xff]
                  %443 = vst [vmem:[%s405 + $0x90] sm:$0xff] %v442
                  %v444 = vld [vmem:[%s404 + $0x198] sm:$0xff]
                  %445 = vst [vmem:[%s405 + $0x98] sm:$0xff] %v444
                  %v446 = vld [vmem:[%s404 + $0x1a0] sm:$0xff]
                  %447 = vst [vmem:[%s405 + $0xa0] sm:$0xff] %v446
                  %v448 = vld [vmem:[%s404 + $0x1a8] sm:$0xff]
                  %449 = vst [vmem:[%s405 + $0xa8] sm:$0xff] %v448
                  %v450 = vld [vmem:[%s404 + $0x1b0] sm:$0xff]
                  %451 = vst [vmem:[%s405 + $0xb0] sm:$0xff] %v450
                  %v452 = vld [vmem:[%s404 + $0x1b8] sm:$0xff]
                  %453 = vst [vmem:[%s405 + $0xb8] sm:$0xff] %v452
                  %v454 = vld [vmem:[%s404 + $0x1c0] sm:$0xff]
                  %455 = vst [vmem:[%s405 + $0xc0] sm:$0xff] %v454
                  %v456 = vld [vmem:[%s404 + $0x1c8] sm:$0xff]
                  %457 = vst [vmem:[%s405 + $0xc8] sm:$0xff] %v456
                  %v458 = vld [vmem:[%s404 + $0x1d0] sm:$0xff]
                  %459 = vst [vmem:[%s405 + $0xd0] sm:$0xff] %v458
                  %v460 = vld [vmem:[%s404 + $0x1d8] sm:$0xff]
                  %461 = vst [vmem:[%s405 + $0xd8] sm:$0xff] %v460
                  %v462 = vld [vmem:[%s404 + $0x1e0] sm:$0xff]
                  %463 = vst [vmem:[%s405 + $0xe0] sm:$0xff] %v462
                  %v464 = vld [vmem:[%s404 + $0x1e8] sm:$0xff]
                  %465 = vst [vmem:[%s405 + $0xe8] sm:$0xff] %v464
                  %v466 = vld [vmem:[%s404 + $0x1f0] sm:$0xff]
                  %467 = vst [vmem:[%s405 + $0xf0] sm:$0xff] %v466
                  %v468 = vld [vmem:[%s404 + $0x1f8] sm:$0xff]
                  %469 = vst [vmem:[%s405 + $0xf8] sm:$0xff] %v468
                $region80: #{tpu_custom_call.1} parent=74 // loop_footer
                  %s403 = sadd.s32 1, %s399
                $region81: #{tpu_custom_call.1} parent=74 // loop_footer_branch
                  %398 = sbr.rel target = $region77
                $region82: #{tpu_custom_call.1} parent=74 // loop_exit
                  _
              $region75: #{tpu_custom_call.1} parent=59 // pred_fallthru
                _
              // Predicated region
              $region83: #{tpu_custom_call.1} parent=59 // pred_check
                _
              $region84: #{tpu_custom_call.1} parent=59 // pred_check_branch
                %471 = sbr.rel target = $region86
              $region85: #{tpu_custom_call.1} parent=59 // pred_region
                _
              $region86: #{tpu_custom_call.1} parent=59 // pred_fallthru
                _
            $region60: #{tpu_custom_call.1} parent=55 // pred_fallthru
              _
            // Predicated region
            $region61: #{tpu_custom_call.1} parent=55 // pred_check
              _
            $region62: #{tpu_custom_call.1} parent=55 // pred_check_branch
              %322 = sbr.rel target = $region64
            $region63: #{tpu_custom_call.1} parent=55 // pred_region
              loop: start=0, step=1, limit=1
              $region65: #{tpu_custom_call.1} parent=63 // loop_pre_header
                _
              $region66: #{tpu_custom_call.1} parent=63 // loop_header
                %s325 = sphi 0, %s329
                %p326 = scmp.ge.s32.totalorder %s325, 1
                %s330 = sphi %s316, %s316
                %s331 = sphi %s310, %s310
              $region67: #{tpu_custom_call.1} parent=63 // loop_header_branch
                %328 = sbr.rel (%p326) target = $region71
              $region68: #{tpu_custom_call.1} parent=63 // loop_body
                %v332 = vld [vmem:[%s330] sm:$0xff]
                %333 = vst [vmem:[%s331] sm:$0xff] %v332
                %v334 = vld [vmem:[%s330 + $0x8] sm:$0xff]
                %335 = vst [vmem:[%s331 + $0x8] sm:$0xff] %v334
                %v336 = vld [vmem:[%s330 + $0x10] sm:$0xff]
                %337 = vst [vmem:[%s331 + $0x10] sm:$0xff] %v336
                %v338 = vld [vmem:[%s330 + $0x18] sm:$0xff]
                %339 = vst [vmem:[%s331 + $0x18] sm:$0xff] %v338
                %v340 = vld [vmem:[%s330 + $0x20] sm:$0xff]
                %341 = vst [vmem:[%s331 + $0x20] sm:$0xff] %v340
                %v342 = vld [vmem:[%s330 + $0x28] sm:$0xff]
                %343 = vst [vmem:[%s331 + $0x28] sm:$0xff] %v342
                %v344 = vld [vmem:[%s330 + $0x30] sm:$0xff]
                %345 = vst [vmem:[%s331 + $0x30] sm:$0xff] %v344
                %v346 = vld [vmem:[%s330 + $0x38] sm:$0xff]
                %347 = vst [vmem:[%s331 + $0x38] sm:$0xff] %v346
                %v348 = vld [vmem:[%s330 + $0x40] sm:$0xff]
                %349 = vst [vmem:[%s331 + $0x40] sm:$0xff] %v348
                %v350 = vld [vmem:[%s330 + $0x48] sm:$0xff]
                %351 = vst [vmem:[%s331 + $0x48] sm:$0xff] %v350
                %v352 = vld [vmem:[%s330 + $0x50] sm:$0xff]
                %353 = vst [vmem:[%s331 + $0x50] sm:$0xff] %v352
                %v354 = vld [vmem:[%s330 + $0x58] sm:$0xff]
                %355 = vst [vmem:[%s331 + $0x58] sm:$0xff] %v354
                %v356 = vld [vmem:[%s330 + $0x60] sm:$0xff]
                %357 = vst [vmem:[%s331 + $0x60] sm:$0xff] %v356
                %v358 = vld [vmem:[%s330 + $0x68] sm:$0xff]
                %359 = vst [vmem:[%s331 + $0x68] sm:$0xff] %v358
                %v360 = vld [vmem:[%s330 + $0x70] sm:$0xff]
                %361 = vst [vmem:[%s331 + $0x70] sm:$0xff] %v360
                %v362 = vld [vmem:[%s330 + $0x78] sm:$0xff]
                %363 = vst [vmem:[%s331 + $0x78] sm:$0xff] %v362
                %v364 = vld [vmem:[%s330 + $0x180] sm:$0xff]
                %365 = vst [vmem:[%s331 + $0x80] sm:$0xff] %v364
                %v366 = vld [vmem:[%s330 + $0x188] sm:$0xff]
                %367 = vst [vmem:[%s331 + $0x88] sm:$0xff] %v366
                %v368 = vld [vmem:[%s330 + $0x190] sm:$0xff]
                %369 = vst [vmem:[%s331 + $0x90] sm:$0xff] %v368
                %v370 = vld [vmem:[%s330 + $0x198] sm:$0xff]
                %371 = vst [vmem:[%s331 + $0x98] sm:$0xff] %v370
                %v372 = vld [vmem:[%s330 + $0x1a0] sm:$0xff]
                %373 = vst [vmem:[%s331 + $0xa0] sm:$0xff] %v372
                %v374 = vld [vmem:[%s330 + $0x1a8] sm:$0xff]
                %375 = vst [vmem:[%s331 + $0xa8] sm:$0xff] %v374
                %v376 = vld [vmem:[%s330 + $0x1b0] sm:$0xff]
                %377 = vst [vmem:[%s331 + $0xb0] sm:$0xff] %v376
                %v378 = vld [vmem:[%s330 + $0x1b8] sm:$0xff]
                %379 = vst [vmem:[%s331 + $0xb8] sm:$0xff] %v378
                %v380 = vld [vmem:[%s330 + $0x1c0] sm:$0xff]
                %381 = vst [vmem:[%s331 + $0xc0] sm:$0xff] %v380
                %v382 = vld [vmem:[%s330 + $0x1c8] sm:$0xff]
                %383 = vst [vmem:[%s331 + $0xc8] sm:$0xff] %v382
                %v384 = vld [vmem:[%s330 + $0x1d0] sm:$0xff]
                %385 = vst [vmem:[%s331 + $0xd0] sm:$0xff] %v384
                %v386 = vld [vmem:[%s330 + $0x1d8] sm:$0xff]
                %387 = vst [vmem:[%s331 + $0xd8] sm:$0xff] %v386
                %v388 = vld [vmem:[%s330 + $0x1e0] sm:$0xff]
                %389 = vst [vmem:[%s331 + $0xe0] sm:$0xff] %v388
                %v390 = vld [vmem:[%s330 + $0x1e8] sm:$0xff]
                %391 = vst [vmem:[%s331 + $0xe8] sm:$0xff] %v390
                %v392 = vld [vmem:[%s330 + $0x1f0] sm:$0xff]
                %393 = vst [vmem:[%s331 + $0xf0] sm:$0xff] %v392
                %v394 = vld [vmem:[%s330 + $0x1f8] sm:$0xff]
                %395 = vst [vmem:[%s331 + $0xf8] sm:$0xff] %v394
              $region69: #{tpu_custom_call.1} parent=63 // loop_footer
                %s329 = sadd.s32 1, %s325
              $region70: #{tpu_custom_call.1} parent=63 // loop_footer_branch
                %324 = sbr.rel target = $region66
              $region71: #{tpu_custom_call.1} parent=63 // loop_exit
                _
            $region64: #{tpu_custom_call.1} parent=55 // pred_fallthru
              _
          $region56: #{tpu_custom_call.1} parent=51 // pred_fallthru
            _
          %472 = vnop
        $region52: #{tpu_custom_call.1} parent=47 // pred_fallthru
          _
      $region48: #{tpu_custom_call.1} parent=5 // pred_fallthru
        _
      %p473 = scmp.le.s32.totalorder 1, %s17
      %p474 = scmp.lt.s32.totalorder %s17, 4
      %p475 = pnand %p473, %p474
      %p476 = pneg %p475
      // Predicated region
      $region87: #{tpu_custom_call.1} parent=5 // pred_check
        _
      $region88: #{tpu_custom_call.1} parent=5 // pred_check_branch
        %478 = sbr.rel (%p475) target = $region90
      $region89: #{tpu_custom_call.1} parent=5 // pred_region
        %s479 = ssub.s32 %s17, 1
        %s480 = sand.u32 %s44, 1
        %s481 = sand.u32 %s44, 1
        %s482 = smul.addr %s481, 256
        %s483 = scalar_lea.vmem [#allocation3], %s482
        // Predicated region
        $region91: #{tpu_custom_call.1} parent=89 // pred_check
          %p484 = pneg %p57
        $region92: #{tpu_custom_call.1} parent=89 // pred_check_branch
          %486 = sbr.rel (%p484) target = $region94
        $region93: #{tpu_custom_call.1} parent=89 // pred_region
          _
        $region94: #{tpu_custom_call.1} parent=89 // pred_fallthru
          _
        // Predicated region
        $region95: #{tpu_custom_call.1} parent=89 // pred_check
          %p487 = pneg %p204
        $region96: #{tpu_custom_call.1} parent=89 // pred_check_branch
          %489 = sbr.rel (%p487) target = $region98
        $region97: #{tpu_custom_call.1} parent=89 // pred_region
          %490 = dma.done [#allocation5], 16384
        $region98: #{tpu_custom_call.1} parent=89 // pred_fallthru
          _
        %s491 = sand.u32 %s44, 1
        %s492 = sand.u32 %s44, 1
        %s493 = smul.addr %s492, 256
        %s494 = scalar_lea.vmem [#allocation3], %s493
        %p495 = pneg %p57
        %p496 = pneg %p54
        %p497 = pneg %p78
        %p498 = pneg %p75
        %p499 = pneg %p99
        %p500 = pneg %p96
        %p501 = pneg %p120
        %p502 = pneg %p117
        %p503 = pneg %p141
        %p504 = pneg %p138
        %p505 = pneg %p162
        %p506 = pneg %p159
        %p507 = pneg %p183
        %p508 = pneg %p180
        %p509 = pneg %p204
        %p510 = pneg %p201
        %p511 = pneg %p225
        %p512 = pneg %p222
        %p513 = pneg %p251
        %p514 = pneg %p248
        %s515 = smul.u32 2, %s26
        %s516 = smul.u32 16, %s27
        %p518 = scmp.eq.s32.totalorder %s27, 0
        // Predicated region
        $region99: #{tpu_custom_call.1} parent=89 // pred_check
          %p519 = pneg %p518
        $region100: #{tpu_custom_call.1} parent=89 // pred_check_branch
          %521 = sbr.rel (%p519) target = $region102
        $region101: #{tpu_custom_call.1} parent=89 // pred_region
          %522 = vst [vmem:[#allocation2] sm:$0xf] -inf
        $region102: #{tpu_custom_call.1} parent=89 // pred_fallthru
          _
        %v523 = vld [vmem:[%s483] sm:$0xff]
        %v524 = vld [vmem:[%s483 + $0x8] sm:$0xff]
        %v525 = vld [vmem:[%s483 + $0x10] sm:$0xff]
        %v526 = vld [vmem:[%s483 + $0x18] sm:$0xff]
        %v527 = vld [vmem:[%s483 + $0x20] sm:$0xff]
        %v528 = vld [vmem:[%s483 + $0x28] sm:$0xff]
        %v529 = vld [vmem:[%s483 + $0x30] sm:$0xff]
        %v530 = vld [vmem:[%s483 + $0x38] sm:$0xff]
        %v531 = vld [vmem:[%s483 + $0x40] sm:$0xff]
        %v532 = vld [vmem:[%s483 + $0x48] sm:$0xff]
        %v533 = vld [vmem:[%s483 + $0x50] sm:$0xff]
        %v534 = vld [vmem:[%s483 + $0x58] sm:$0xff]
        %v535 = vld [vmem:[%s483 + $0x60] sm:$0xff]
        %v536 = vld [vmem:[%s483 + $0x68] sm:$0xff]
        %v537 = vld [vmem:[%s483 + $0x70] sm:$0xff]
        %v538 = vld [vmem:[%s483 + $0x78] sm:$0xff]
        %v539 = vld [vmem:[%s483 + $0x80] sm:$0xff]
        %v540 = vld [vmem:[%s483 + $0x88] sm:$0xff]
        %v541 = vld [vmem:[%s483 + $0x90] sm:$0xff]
        %v542 = vld [vmem:[%s483 + $0x98] sm:$0xff]
        %v543 = vld [vmem:[%s483 + $0xa0] sm:$0xff]
        %v544 = vld [vmem:[%s483 + $0xa8] sm:$0xff]
        %v545 = vld [vmem:[%s483 + $0xb0] sm:$0xff]
        %v546 = vld [vmem:[%s483 + $0xb8] sm:$0xff]
        %v547 = vld [vmem:[%s483 + $0xc0] sm:$0xff]
        %v548 = vld [vmem:[%s483 + $0xc8] sm:$0xff]
        %v549 = vld [vmem:[%s483 + $0xd0] sm:$0xff]
        %v550 = vld [vmem:[%s483 + $0xd8] sm:$0xff]
        %v551 = vld [vmem:[%s483 + $0xe0] sm:$0xff]
        %v552 = vld [vmem:[%s483 + $0xe8] sm:$0xff]
        %v553 = vld [vmem:[%s483 + $0xf0] sm:$0xff]
        %v554 = vld [vmem:[%s483 + $0xf8] sm:$0xff]
        %v555 = vld [vmem:[%s1] sm:$0x7]
        %557 = vset.pattern.permute.xlu0 0
        %558 = vperm.xlu0 %557, %v523
        %v559 = vpop.permute.xlu0 %558
        %562 = vset.pattern.permute.xlu0 0
        %563 = vperm.xlu0 %562, %v524
        %v564 = vpop.permute.xlu0 %563
        %567 = vset.pattern.permute.xlu0 0
        %568 = vperm.xlu0 %567, %v525
        %v569 = vpop.permute.xlu0 %568
        %572 = vset.pattern.permute.xlu0 0
        %573 = vperm.xlu0 %572, %v526
        %v574 = vpop.permute.xlu0 %573
        %577 = vset.pattern.permute.xlu0 0
        %578 = vperm.xlu0 %577, %v527
        %v579 = vpop.permute.xlu0 %578
        %582 = vset.pattern.permute.xlu0 0
        %583 = vperm.xlu0 %582, %v528
        %v584 = vpop.permute.xlu0 %583
        %587 = vset.pattern.permute.xlu0 0
        %588 = vperm.xlu0 %587, %v529
        %v589 = vpop.permute.xlu0 %588
        %592 = vset.pattern.permute.xlu0 0
        %593 = vperm.xlu0 %592, %v530
        %v594 = vpop.permute.xlu0 %593
        %597 = vset.pattern.permute.xlu0 0
        %598 = vperm.xlu0 %597, %v531
        %v599 = vpop.permute.xlu0 %598
        %602 = vset.pattern.permute.xlu0 0
        %603 = vperm.xlu0 %602, %v532
        %v604 = vpop.permute.xlu0 %603
        %607 = vset.pattern.permute.xlu0 0
        %608 = vperm.xlu0 %607, %v533
        %v609 = vpop.permute.xlu0 %608
        %612 = vset.pattern.permute.xlu0 0
        %613 = vperm.xlu0 %612, %v534
        %v614 = vpop.permute.xlu0 %613
        %617 = vset.pattern.permute.xlu0 0
        %618 = vperm.xlu0 %617, %v535
        %v619 = vpop.permute.xlu0 %618
        %622 = vset.pattern.permute.xlu0 0
        %623 = vperm.xlu0 %622, %v536
        %v624 = vpop.permute.xlu0 %623
        %627 = vset.pattern.permute.xlu0 0
        %628 = vperm.xlu0 %627, %v537
        %v629 = vpop.permute.xlu0 %628
        %632 = vset.pattern.permute.xlu0 0
        %633 = vperm.xlu0 %632, %v538
        %v634 = vpop.permute.xlu0 %633
        %637 = vset.pattern.permute.xlu0 0
        %638 = vperm.xlu0 %637, %v539
        %v639 = vpop.permute.xlu0 %638
        %642 = vset.pattern.permute.xlu0 0
        %643 = vperm.xlu0 %642, %v540
        %v644 = vpop.permute.xlu0 %643
        %647 = vset.pattern.permute.xlu0 0
        %648 = vperm.xlu0 %647, %v541
        %v649 = vpop.permute.xlu0 %648
        %652 = vset.pattern.permute.xlu0 0
        %653 = vperm.xlu0 %652, %v542
        %v654 = vpop.permute.xlu0 %653
        %657 = vset.pattern.permute.xlu0 0
        %658 = vperm.xlu0 %657, %v543
        %v659 = vpop.permute.xlu0 %658
        %662 = vset.pattern.permute.xlu0 0
        %663 = vperm.xlu0 %662, %v544
        %v664 = vpop.permute.xlu0 %663
        %667 = vset.pattern.permute.xlu0 0
        %668 = vperm.xlu0 %667, %v545
        %v669 = vpop.permute.xlu0 %668
        %672 = vset.pattern.permute.xlu0 0
        %673 = vperm.xlu0 %672, %v546
        %v674 = vpop.permute.xlu0 %673
        %677 = vset.pattern.permute.xlu0 0
        %678 = vperm.xlu0 %677, %v547
        %v679 = vpop.permute.xlu0 %678
        %682 = vset.pattern.permute.xlu0 0
        %683 = vperm.xlu0 %682, %v548
        %v684 = vpop.permute.xlu0 %683
        %687 = vset.pattern.permute.xlu0 0
        %688 = vperm.xlu0 %687, %v549
        %v689 = vpop.permute.xlu0 %688
        %692 = vset.pattern.permute.xlu0 0
        %693 = vperm.xlu0 %692, %v550
        %v694 = vpop.permute.xlu0 %693
        %697 = vset.pattern.permute.xlu0 0
        %698 = vperm.xlu0 %697, %v551
        %v699 = vpop.permute.xlu0 %698
        %702 = vset.pattern.permute.xlu0 0
        %703 = vperm.xlu0 %702, %v552
        %v704 = vpop.permute.xlu0 %703
        %707 = vset.pattern.permute.xlu0 0
        %708 = vperm.xlu0 %707, %v553
        %v709 = vpop.permute.xlu0 %708
        %712 = vset.pattern.permute.xlu0 0
        %713 = vperm.xlu0 %712, %v554
        %v714 = vpop.permute.xlu0 %713
        %v716 = vlaneseq
        %v717 = vshrl.u32 %v716, 7
        %v718 = vsub.s32 0, %v717
        %v719 = vrot.slane %v555, %v718
        %v720 = vmul.f32 %v559, %v719
        %v721 = vmul.f32 %v564, %v719
        %v722 = vmul.f32 %v569, %v719
        %v723 = vmul.f32 %v574, %v719
        %v724 = vmul.f32 %v579, %v719
        %v725 = vmul.f32 %v584, %v719
        %v726 = vmul.f32 %v589, %v719
        %v727 = vmul.f32 %v594, %v719
        %v728 = vmul.f32 %v599, %v719
        %v729 = vmul.f32 %v604, %v719
        %v730 = vmul.f32 %v609, %v719
        %v731 = vmul.f32 %v614, %v719
        %v732 = vmul.f32 %v619, %v719
        %v733 = vmul.f32 %v624, %v719
        %v734 = vmul.f32 %v629, %v719
        %v735 = vmul.f32 %v634, %v719
        %v736 = vmul.f32 %v639, %v719
        %v737 = vmul.f32 %v644, %v719
        %v738 = vmul.f32 %v649, %v719
        %v739 = vmul.f32 %v654, %v719
        %v740 = vmul.f32 %v659, %v719
        %v741 = vmul.f32 %v664, %v719
        %v742 = vmul.f32 %v669, %v719
        %v743 = vmul.f32 %v674, %v719
        %v744 = vmul.f32 %v679, %v719
        %v745 = vmul.f32 %v684, %v719
        %v746 = vmul.f32 %v689, %v719
        %v747 = vmul.f32 %v694, %v719
        %v748 = vmul.f32 %v699, %v719
        %v749 = vmul.f32 %v704, %v719
        %v750 = vmul.f32 %v709, %v719
        %v751 = vmul.f32 %v714, %v719
        %752 = vset.pattern.permute.xlu0 1
        %753 = vperm.xlu0 %752, %v523
        %v754 = vpop.permute.xlu0 %753
        %756 = vset.pattern.permute.xlu0 1
        %757 = vperm.xlu0 %756, %v524
        %v758 = vpop.permute.xlu0 %757
        %760 = vset.pattern.permute.xlu0 1
        %761 = vperm.xlu0 %760, %v525
        %v762 = vpop.permute.xlu0 %761
        %764 = vset.pattern.permute.xlu0 1
        %765 = vperm.xlu0 %764, %v526
        %v766 = vpop.permute.xlu0 %765
        %768 = vset.pattern.permute.xlu0 1
        %769 = vperm.xlu0 %768, %v527
        %v770 = vpop.permute.xlu0 %769
        %772 = vset.pattern.permute.xlu0 1
        %773 = vperm.xlu0 %772, %v528
        %v774 = vpop.permute.xlu0 %773
        %776 = vset.pattern.permute.xlu0 1
        %777 = vperm.xlu0 %776, %v529
        %v778 = vpop.permute.xlu0 %777
        %780 = vset.pattern.permute.xlu0 1
        %781 = vperm.xlu0 %780, %v530
        %v782 = vpop.permute.xlu0 %781
        %784 = vset.pattern.permute.xlu0 1
        %785 = vperm.xlu0 %784, %v531
        %v786 = vpop.permute.xlu0 %785
        %788 = vset.pattern.permute.xlu0 1
        %789 = vperm.xlu0 %788, %v532
        %v790 = vpop.permute.xlu0 %789
        %792 = vset.pattern.permute.xlu0 1
        %793 = vperm.xlu0 %792, %v533
        %v794 = vpop.permute.xlu0 %793
        %796 = vset.pattern.permute.xlu0 1
        %797 = vperm.xlu0 %796, %v534
        %v798 = vpop.permute.xlu0 %797
        %800 = vset.pattern.permute.xlu0 1
        %801 = vperm.xlu0 %800, %v535
        %v802 = vpop.permute.xlu0 %801
        %804 = vset.pattern.permute.xlu0 1
        %805 = vperm.xlu0 %804, %v536
        %v806 = vpop.permute.xlu0 %805
        %808 = vset.pattern.permute.xlu0 1
        %809 = vperm.xlu0 %808, %v537
        %v810 = vpop.permute.xlu0 %809
        %812 = vset.pattern.permute.xlu0 1
        %813 = vperm.xlu0 %812, %v538
        %v814 = vpop.permute.xlu0 %813
        %816 = vset.pattern.permute.xlu0 1
        %817 = vperm.xlu0 %816, %v539
        %v818 = vpop.permute.xlu0 %817
        %820 = vset.pattern.permute.xlu0 1
        %821 = vperm.xlu0 %820, %v540
        %v822 = vpop.permute.xlu0 %821
        %824 = vset.pattern.permute.xlu0 1
        %825 = vperm.xlu0 %824, %v541
        %v826 = vpop.permute.xlu0 %825
        %828 = vset.pattern.permute.xlu0 1
        %829 = vperm.xlu0 %828, %v542
        %v830 = vpop.permute.xlu0 %829
        %832 = vset.pattern.permute.xlu0 1
        %833 = vperm.xlu0 %832, %v543
        %v834 = vpop.permute.xlu0 %833
        %836 = vset.pattern.permute.xlu0 1
        %837 = vperm.xlu0 %836, %v544
        %v838 = vpop.permute.xlu0 %837
        %840 = vset.pattern.permute.xlu0 1
        %841 = vperm.xlu0 %840, %v545
        %v842 = vpop.permute.xlu0 %841
        %844 = vset.pattern.permute.xlu0 1
        %845 = vperm.xlu0 %844, %v546
        %v846 = vpop.permute.xlu0 %845
        %848 = vset.pattern.permute.xlu0 1
        %849 = vperm.xlu0 %848, %v547
        %v850 = vpop.permute.xlu0 %849
        %852 = vset.pattern.permute.xlu0 1
        %853 = vperm.xlu0 %852, %v548
        %v854 = vpop.permute.xlu0 %853
        %856 = vset.pattern.permute.xlu0 1
        %857 = vperm.xlu0 %856, %v549
        %v858 = vpop.permute.xlu0 %857
        %860 = vset.pattern.permute.xlu0 1
        %861 = vperm.xlu0 %860, %v550
        %v862 = vpop.permute.xlu0 %861
        %864 = vset.pattern.permute.xlu0 1
        %865 = vperm.xlu0 %864, %v551
        %v866 = vpop.permute.xlu0 %865
        %868 = vset.pattern.permute.xlu0 1
        %869 = vperm.xlu0 %868, %v552
        %v870 = vpop.permute.xlu0 %869
        %872 = vset.pattern.permute.xlu0 1
        %873 = vperm.xlu0 %872, %v553
        %v874 = vpop.permute.xlu0 %873
        %876 = vset.pattern.permute.xlu0 1
        %877 = vperm.xlu0 %876, %v554
        %v878 = vpop.permute.xlu0 %877
        %v880 = vlaneseq
        %v881 = vshrl.u32 %v880, 7
        %v882 = vsub.s32 1, %v881
        %v883 = vrot.slane %v555, %v882
        %v884 = vmul.f32 %v754, %v883
        %v885 = vmul.f32 %v758, %v883
        %v886 = vmul.f32 %v762, %v883
        %v887 = vmul.f32 %v766, %v883
        %v888 = vmul.f32 %v770, %v883
        %v889 = vmul.f32 %v774, %v883
        %v890 = vmul.f32 %v778, %v883
        %v891 = vmul.f32 %v782, %v883
        %v892 = vmul.f32 %v786, %v883
        %v893 = vmul.f32 %v790, %v883
        %v894 = vmul.f32 %v794, %v883
        %v895 = vmul.f32 %v798, %v883
        %v896 = vmul.f32 %v802, %v883
        %v897 = vmul.f32 %v806, %v883
        %v898 = vmul.f32 %v810, %v883
        %v899 = vmul.f32 %v814, %v883
        %v900 = vmul.f32 %v818, %v883
        %v901 = vmul.f32 %v822, %v883
        %v902 = vmul.f32 %v826, %v883
        %v903 = vmul.f32 %v830, %v883
        %v904 = vmul.f32 %v834, %v883
        %v905 = vmul.f32 %v838, %v883
        %v906 = vmul.f32 %v842, %v883
        %v907 = vmul.f32 %v846, %v883
        %v908 = vmul.f32 %v850, %v883
        %v909 = vmul.f32 %v854, %v883
        %v910 = vmul.f32 %v858, %v883
        %v911 = vmul.f32 %v862, %v883
        %v912 = vmul.f32 %v866, %v883
        %v913 = vmul.f32 %v870, %v883
        %v914 = vmul.f32 %v874, %v883
        %v915 = vmul.f32 %v878, %v883
        %v916 = vadd.f32 %v720, %v884
        %v917 = vadd.f32 %v721, %v885
        %v918 = vadd.f32 %v722, %v886
        %v919 = vadd.f32 %v723, %v887
        %v920 = vadd.f32 %v724, %v888
        %v921 = vadd.f32 %v725, %v889
        %v922 = vadd.f32 %v726, %v890
        %v923 = vadd.f32 %v727, %v891
        %v924 = vadd.f32 %v728, %v892
        %v925 = vadd.f32 %v729, %v893
        %v926 = vadd.f32 %v730, %v894
        %v927 = vadd.f32 %v731, %v895
        %v928 = vadd.f32 %v732, %v896
        %v929 = vadd.f32 %v733, %v897
        %v930 = vadd.f32 %v734, %v898
        %v931 = vadd.f32 %v735, %v899
        %v932 = vadd.f32 %v736, %v900
        %v933 = vadd.f32 %v737, %v901
        %v934 = vadd.f32 %v738, %v902
        %v935 = vadd.f32 %v739, %v903
        %v936 = vadd.f32 %v740, %v904
        %v937 = vadd.f32 %v741, %v905
        %v938 = vadd.f32 %v742, %v906
        %v939 = vadd.f32 %v743, %v907
        %v940 = vadd.f32 %v744, %v908
        %v941 = vadd.f32 %v745, %v909
        %v942 = vadd.f32 %v746, %v910
        %v943 = vadd.f32 %v747, %v911
        %v944 = vadd.f32 %v748, %v912
        %v945 = vadd.f32 %v749, %v913
        %v946 = vadd.f32 %v750, %v914
        %v947 = vadd.f32 %v751, %v915
        %948 = vset.pattern.permute.xlu0 2
        %949 = vperm.xlu0 %948, %v523
        %v950 = vpop.permute.xlu0 %949
        %952 = vset.pattern.permute.xlu0 2
        %953 = vperm.xlu0 %952, %v524
        %v954 = vpop.permute.xlu0 %953
        %956 = vset.pattern.permute.xlu0 2
        %957 = vperm.xlu0 %956, %v525
        %v958 = vpop.permute.xlu0 %957
        %960 = vset.pattern.permute.xlu0 2
        %961 = vperm.xlu0 %960, %v526
        %v962 = vpop.permute.xlu0 %961
        %964 = vset.pattern.permute.xlu0 2
        %965 = vperm.xlu0 %964, %v527
        %v966 = vpop.permute.xlu0 %965
        %968 = vset.pattern.permute.xlu0 2
        %969 = vperm.xlu0 %968, %v528
        %v970 = vpop.permute.xlu0 %969
        %972 = vset.pattern.permute.xlu0 2
        %973 = vperm.xlu0 %972, %v529
        %v974 = vpop.permute.xlu0 %973
        %976 = vset.pattern.permute.xlu0 2
        %977 = vperm.xlu0 %976, %v530
        %v978 = vpop.permute.xlu0 %977
        %980 = vset.pattern.permute.xlu0 2
        %981 = vperm.xlu0 %980, %v531
        %v982 = vpop.permute.xlu0 %981
        %984 = vset.pattern.permute.xlu0 2
        %985 = vperm.xlu0 %984, %v532
        %v986 = vpop.permute.xlu0 %985
        %988 = vset.pattern.permute.xlu0 2
        %989 = vperm.xlu0 %988, %v533
        %v990 = vpop.permute.xlu0 %989
        %992 = vset.pattern.permute.xlu0 2
        %993 = vperm.xlu0 %992, %v534
        %v994 = vpop.permute.xlu0 %993
        %996 = vset.pattern.permute.xlu0 2
        %997 = vperm.xlu0 %996, %v535
        %v998 = vpop.permute.xlu0 %997
        %1000 = vset.pattern.permute.xlu0 2
        %1001 = vperm.xlu0 %1000, %v536
        %v1002 = vpop.permute.xlu0 %1001
        %1004 = vset.pattern.permute.xlu0 2
        %1005 = vperm.xlu0 %1004, %v537
        %v1006 = vpop.permute.xlu0 %1005
        %1008 = vset.pattern.permute.xlu0 2
        %1009 = vperm.xlu0 %1008, %v538
        %v1010 = vpop.permute.xlu0 %1009
        %1012 = vset.pattern.permute.xlu0 2
        %1013 = vperm.xlu0 %1012, %v539
        %v1014 = vpop.permute.xlu0 %1013
        %1016 = vset.pattern.permute.xlu0 2
        %1017 = vperm.xlu0 %1016, %v540
        %v1018 = vpop.permute.xlu0 %1017
        %1020 = vset.pattern.permute.xlu0 2
        %1021 = vperm.xlu0 %1020, %v541
        %v1022 = vpop.permute.xlu0 %1021
        %1024 = vset.pattern.permute.xlu0 2
        %1025 = vperm.xlu0 %1024, %v542
        %v1026 = vpop.permute.xlu0 %1025
        %1028 = vset.pattern.permute.xlu0 2
        %1029 = vperm.xlu0 %1028, %v543
        %v1030 = vpop.permute.xlu0 %1029
        %1032 = vset.pattern.permute.xlu0 2
        %1033 = vperm.xlu0 %1032, %v544
        %v1034 = vpop.permute.xlu0 %1033
        %1036 = vset.pattern.permute.xlu0 2
        %1037 = vperm.xlu0 %1036, %v545
        %v1038 = vpop.permute.xlu0 %1037
        %1040 = vset.pattern.permute.xlu0 2
        %1041 = vperm.xlu0 %1040, %v546
        %v1042 = vpop.permute.xlu0 %1041
        %1044 = vset.pattern.permute.xlu0 2
        %1045 = vperm.xlu0 %1044, %v547
        %v1046 = vpop.permute.xlu0 %1045
        %1048 = vset.pattern.permute.xlu0 2
        %1049 = vperm.xlu0 %1048, %v548
        %v1050 = vpop.permute.xlu0 %1049
        %1052 = vset.pattern.permute.xlu0 2
        %1053 = vperm.xlu0 %1052, %v549
        %v1054 = vpop.permute.xlu0 %1053
        %1056 = vset.pattern.permute.xlu0 2
        %1057 = vperm.xlu0 %1056, %v550
        %v1058 = vpop.permute.xlu0 %1057
        %1060 = vset.pattern.permute.xlu0 2
        %1061 = vperm.xlu0 %1060, %v551
        %v1062 = vpop.permute.xlu0 %1061
        %1064 = vset.pattern.permute.xlu0 2
        %1065 = vperm.xlu0 %1064, %v552
        %v1066 = vpop.permute.xlu0 %1065
        %1068 = vset.pattern.permute.xlu0 2
        %1069 = vperm.xlu0 %1068, %v553
        %v1070 = vpop.permute.xlu0 %1069
        %1072 = vset.pattern.permute.xlu0 2
        %1073 = vperm.xlu0 %1072, %v554
        %v1074 = vpop.permute.xlu0 %1073
        %v1076 = vlaneseq
        %v1077 = vshrl.u32 %v1076, 7
        %v1078 = vsub.s32 2, %v1077
        %v1079 = vrot.slane %v555, %v1078
        %v1080 = vmul.f32 %v950, %v1079
        %v1081 = vmul.f32 %v954, %v1079
        %v1082 = vmul.f32 %v958, %v1079
        %v1083 = vmul.f32 %v962, %v1079
        %v1084 = vmul.f32 %v966, %v1079
        %v1085 = vmul.f32 %v970, %v1079
        %v1086 = vmul.f32 %v974, %v1079
        %v1087 = vmul.f32 %v978, %v1079
        %v1088 = vmul.f32 %v982, %v1079
        %v1089 = vmul.f32 %v986, %v1079
        %v1090 = vmul.f32 %v990, %v1079
        %v1091 = vmul.f32 %v994, %v1079
        %v1092 = vmul.f32 %v998, %v1079
        %v1093 = vmul.f32 %v1002, %v1079
        %v1094 = vmul.f32 %v1006, %v1079
        %v1095 = vmul.f32 %v1010, %v1079
        %v1096 = vmul.f32 %v1014, %v1079
        %v1097 = vmul.f32 %v1018, %v1079
        %v1098 = vmul.f32 %v1022, %v1079
        %v1099 = vmul.f32 %v1026, %v1079
        %v1100 = vmul.f32 %v1030, %v1079
        %v1101 = vmul.f32 %v1034, %v1079
        %v1102 = vmul.f32 %v1038, %v1079
        %v1103 = vmul.f32 %v1042, %v1079
        %v1104 = vmul.f32 %v1046, %v1079
        %v1105 = vmul.f32 %v1050, %v1079
        %v1106 = vmul.f32 %v1054, %v1079
        %v1107 = vmul.f32 %v1058, %v1079
        %v1108 = vmul.f32 %v1062, %v1079
        %v1109 = vmul.f32 %v1066, %v1079
        %v1110 = vmul.f32 %v1070, %v1079
        %v1111 = vmul.f32 %v1074, %v1079
        %v1112 = vadd.f32 %v916, %v1080
        %v1113 = vadd.f32 %v917, %v1081
        %v1114 = vadd.f32 %v918, %v1082
        %v1115 = vadd.f32 %v919, %v1083
        %v1116 = vadd.f32 %v920, %v1084
        %v1117 = vadd.f32 %v921, %v1085
        %v1118 = vadd.f32 %v922, %v1086
        %v1119 = vadd.f32 %v923, %v1087
        %v1120 = vadd.f32 %v924, %v1088
        %v1121 = vadd.f32 %v925, %v1089
        %v1122 = vadd.f32 %v926, %v1090
        %v1123 = vadd.f32 %v927, %v1091
        %v1124 = vadd.f32 %v928, %v1092
        %v1125 = vadd.f32 %v929, %v1093
        %v1126 = vadd.f32 %v930, %v1094
        %v1127 = vadd.f32 %v931, %v1095
        %v1128 = vadd.f32 %v932, %v1096
        %v1129 = vadd.f32 %v933, %v1097
        %v1130 = vadd.f32 %v934, %v1098
        %v1131 = vadd.f32 %v935, %v1099
        %v1132 = vadd.f32 %v936, %v1100
        %v1133 = vadd.f32 %v937, %v1101
        %v1134 = vadd.f32 %v938, %v1102
        %v1135 = vadd.f32 %v939, %v1103
        %v1136 = vadd.f32 %v940, %v1104
        %v1137 = vadd.f32 %v941, %v1105
        %v1138 = vadd.f32 %v942, %v1106
        %v1139 = vadd.f32 %v943, %v1107
        %v1140 = vadd.f32 %v944, %v1108
        %v1141 = vadd.f32 %v945, %v1109
        %v1142 = vadd.f32 %v946, %v1110
        %v1143 = vadd.f32 %v947, %v1111
        %v1144 = vld [vmem:[%s2] sm:$0x1]
        %v1146 = vlaneseq
        %v1147 = vshrl.u32 %v1146, 7
        %v1148 = vsub.s32 0, %v1147
        %v1149 = vrot.slane %v1144, %v1148
        %v1151 = vadd.f32 %v1112, %v1149
        %v1152 = vadd.f32 %v1113, %v1149
        %v1153 = vadd.f32 %v1114, %v1149
        %v1154 = vadd.f32 %v1115, %v1149
        %v1155 = vadd.f32 %v1116, %v1149
        %v1156 = vadd.f32 %v1117, %v1149
        %v1157 = vadd.f32 %v1118, %v1149
        %v1158 = vadd.f32 %v1119, %v1149
        %v1159 = vadd.f32 %v1120, %v1149
        %v1160 = vadd.f32 %v1121, %v1149
        %v1161 = vadd.f32 %v1122, %v1149
        %v1162 = vadd.f32 %v1123, %v1149
        %v1163 = vadd.f32 %v1124, %v1149
        %v1164 = vadd.f32 %v1125, %v1149
        %v1165 = vadd.f32 %v1126, %v1149
        %v1166 = vadd.f32 %v1127, %v1149
        %v1167 = vadd.f32 %v1128, %v1149
        %v1168 = vadd.f32 %v1129, %v1149
        %v1169 = vadd.f32 %v1130, %v1149
        %v1170 = vadd.f32 %v1131, %v1149
        %v1171 = vadd.f32 %v1132, %v1149
        %v1172 = vadd.f32 %v1133, %v1149
        %v1173 = vadd.f32 %v1134, %v1149
        %v1174 = vadd.f32 %v1135, %v1149
        %v1175 = vadd.f32 %v1136, %v1149
        %v1176 = vadd.f32 %v1137, %v1149
        %v1177 = vadd.f32 %v1138, %v1149
        %v1178 = vadd.f32 %v1139, %v1149
        %v1179 = vadd.f32 %v1140, %v1149
        %v1180 = vadd.f32 %v1141, %v1149
        %v1181 = vadd.f32 %v1142, %v1149
        %v1182 = vadd.f32 %v1143, %v1149
        %v1183 = vmax.f32 %v1151, 0.0
        %v1184 = vmax.f32 %v1152, 0.0
        %v1185 = vmax.f32 %v1153, 0.0
        %v1186 = vmax.f32 %v1154, 0.0
        %v1187 = vmax.f32 %v1155, 0.0
        %v1188 = vmax.f32 %v1156, 0.0
        %v1189 = vmax.f32 %v1157, 0.0
        %v1190 = vmax.f32 %v1158, 0.0
        %v1191 = vmax.f32 %v1159, 0.0
        %v1192 = vmax.f32 %v1160, 0.0
        %v1193 = vmax.f32 %v1161, 0.0
        %v1194 = vmax.f32 %v1162, 0.0
        %v1195 = vmax.f32 %v1163, 0.0
        %v1196 = vmax.f32 %v1164, 0.0
        %v1197 = vmax.f32 %v1165, 0.0
        %v1198 = vmax.f32 %v1166, 0.0
        %v1199 = vmax.f32 %v1167, 0.0
        %v1200 = vmax.f32 %v1168, 0.0
        %v1201 = vmax.f32 %v1169, 0.0
        %v1202 = vmax.f32 %v1170, 0.0
        %v1203 = vmax.f32 %v1171, 0.0
        %v1204 = vmax.f32 %v1172, 0.0
        %v1205 = vmax.f32 %v1173, 0.0
        %v1206 = vmax.f32 %v1174, 0.0
        %v1207 = vmax.f32 %v1175, 0.0
        %v1208 = vmax.f32 %v1176, 0.0
        %v1209 = vmax.f32 %v1177, 0.0
        %v1210 = vmax.f32 %v1178, 0.0
        %v1211 = vmax.f32 %v1179, 0.0
        %v1212 = vmax.f32 %v1180, 0.0
        %v1213 = vmax.f32 %v1181, 0.0
        %v1214 = vmax.f32 %v1182, 0.0
        %v1215 = vpack.c.bf16 %v1184, %v1183
        %v1216 = vpack.c.bf16 %v1186, %v1185
        %v1217 = vpack.c.bf16 %v1188, %v1187
        %v1218 = vpack.c.bf16 %v1190, %v1189
        %v1219 = vpack.c.bf16 %v1192, %v1191
        %v1220 = vpack.c.bf16 %v1194, %v1193
        %v1221 = vpack.c.bf16 %v1196, %v1195
        %v1222 = vpack.c.bf16 %v1198, %v1197
        %v1223 = vpack.c.bf16 %v1200, %v1199
        %v1224 = vpack.c.bf16 %v1202, %v1201
        %v1225 = vpack.c.bf16 %v1204, %v1203
        %v1226 = vpack.c.bf16 %v1206, %v1205
        %v1227 = vpack.c.bf16 %v1208, %v1207
        %v1228 = vpack.c.bf16 %v1210, %v1209
        %v1229 = vpack.c.bf16 %v1212, %v1211
        %v1230 = vpack.c.bf16 %v1214, %v1213
        %v1231 = vld [vmem:[%s3] sm:$0xf]
        %v1232 = vld [vmem:[%s3 + $0x4] sm:$0xf]
        %v1233 = vld [vmem:[%s3 + $0x8] sm:$0xf]
        %v1234 = vld [vmem:[%s3 + $0xc] sm:$0xf]
        %v1235 = vld [vmem:[%s3 + $0x10] sm:$0xf]
        %v1236 = vld [vmem:[%s3 + $0x14] sm:$0xf]
        %v1237 = vld [vmem:[%s3 + $0x18] sm:$0xf]
        %v1238 = vld [vmem:[%s3 + $0x1c] sm:$0xf]
        %v1239 = vld [vmem:[%s4] sm:$0x1]
        %v1241 = vlaneseq
        %v1242 = vshrl.u32 %v1241, 7
        %v1243 = vsub.s32 0, %v1242
        %v1244 = vrot.slane %v1239, %v1243
        %v1254 = vunpack.c.l.b16 %v1231
        %v1255 = vunpack.c.l.b16 %v1232
        %v1256 = vunpack.c.l.b16 %v1233
        %v1257 = vunpack.c.l.b16 %v1234
        %v1258 = vunpack.c.l.b16 %v1235
        %v1259 = vunpack.c.l.b16 %v1236
        %v1260 = vunpack.c.l.b16 %v1237
        %v1261 = vunpack.c.l.b16 %v1238
        %v1262 = vpack.c.b16 %v1255, %v1254
        %v1263 = vpack.c.b16 %v1257, %v1256
        %v1264 = vpack.c.b16 %v1259, %v1258
        %v1265 = vpack.c.b16 %v1261, %v1260
        %vm1270 = vcmask 523264
        %v1272 = vsel %vm1270, %v1215, 0
        %v1275 = vsel %vm1270, %v1216, 0
        %v1278 = vsel %vm1270, %v1217, 0
        %v1281 = vsel %vm1270, %v1218, 0
        %v1284 = vsel %vm1270, %v1219, 0
        %v1287 = vsel %vm1270, %v1220, 0
        %v1290 = vsel %vm1270, %v1221, 0
        %v1293 = vsel %vm1270, %v1222, 0
        %v1296 = vsel %vm1270, %v1223, 0
        %v1299 = vsel %vm1270, %v1224, 0
        %v1302 = vsel %vm1270, %v1225, 0
        %v1305 = vsel %vm1270, %v1226, 0
        %v1308 = vsel %vm1270, %v1227, 0
        %v1311 = vsel %vm1270, %v1228, 0
        %v1314 = vsel %vm1270, %v1229, 0
        %v1317 = vsel %vm1270, %v1230, 0
        %1319 = vmatprep.subr.bf16.mxu0 0
        %1320 = vmatpush1.bf16.msra.mxu0 %v1262
        %1321 = vmatprep.subr.bf16.mxu0 0
        %1322 = vmatpush1.bf16.msra.mxu0 %v1263
        %1323 = vmatprep.subr.bf16.mxu0 0
        %1324 = vmatpush1.bf16.msra.mxu0 %v1264
        %1325 = vmatprep.subr.bf16.mxu0 0
        %1326 = vmatpush1.bf16.msra.mxu0 %v1265
        %1327 = vmatprep.subr.bf16.mxu0 0
        %1328 = vmatpush1.bf16.msra.mxu0 0
        %1329 = vmatprep.subr.bf16.mxu0 0
        %1330 = vmatpush1.bf16.msra.mxu0 0
        %1331 = vmatprep.subr.bf16.mxu0 0
        %1332 = vmatpush1.bf16.msra.mxu0 0
        %1333 = vmatprep.subr.bf16.mxu0 0
        %1334 = vmatpush1.bf16.msra.mxu0 0
        %1335 = vmatprep.subr.bf16.mxu0 0
        %1336 = vmatpush1.bf16.msra.mxu0 0
        %1337 = vmatprep.subr.bf16.mxu0 0
        %1338 = vmatpush1.bf16.msra.mxu0 0
        %1339 = vmatprep.subr.bf16.mxu0 0
        %1340 = vmatpush1.bf16.msra.mxu0 0
        %1341 = vmatprep.subr.bf16.mxu0 0
        %1342 = vmatpush1.bf16.msra.mxu0 0
        %1343 = vmatprep.subr.bf16.mxu0 0
        %1344 = vmatpush1.bf16.msra.mxu0 0
        %1345 = vmatprep.subr.bf16.mxu0 0
        %1346 = vmatpush1.bf16.msra.mxu0 0
        %1347 = vmatprep.subr.bf16.mxu0 0
        %1348 = vmatpush1.bf16.msra.mxu0 0
        %1349 = vmatprep.subr.bf16.mxu0 0
        %1350 = vmatpush1.bf16.msra.mxu0 0
        %1351 = vmatprep.mubr.bf16.mxu0 0
        %1352 = vmatmul.mubr.bf16.gmra.mrb[0].mxu0 %v1272
        %v1353 = vpop.f32.mrb[0].mxu0
        %v1354 = vadd.f32 %v1244, %v1353
        %v1355 = vpop.f32.mrb[0].mxu0
        %v1356 = vpop.f32.mrb[0].mxu0
        %v1357 = vadd.f32 %v1244, %v1356
        %v1358 = vpop.f32.mrb[0].mxu0
        %1359 = vmatprep.mubr.bf16.mxu0 0
        %1360 = vmatmul.mubr.bf16.gmra.mrb[0].mxu0 %v1275
        %v1361 = vpop.f32.mrb[0].mxu0
        %v1362 = vadd.f32 %v1244, %v1361
        %v1363 = vpop.f32.mrb[0].mxu0
        %v1364 = vpop.f32.mrb[0].mxu0
        %v1365 = vadd.f32 %v1244, %v1364
        %v1366 = vpop.f32.mrb[0].mxu0
        %1367 = vmatprep.mubr.bf16.mxu0 0
        %1368 = vmatmul.mubr.bf16.gmra.mrb[0].mxu0 %v1278
        %v1369 = vpop.f32.mrb[0].mxu0
        %v1370 = vadd.f32 %v1244, %v1369
        %v1371 = vpop.f32.mrb[0].mxu0
        %v1372 = vpop.f32.mrb[0].mxu0
        %v1373 = vadd.f32 %v1244, %v1372
        %v1374 = vpop.f32.mrb[0].mxu0
        %1375 = vmatprep.mubr.bf16.mxu0 0
        %1376 = vmatmul.mubr.bf16.gmra.mrb[0].mxu0 %v1281
        %v1377 = vpop.f32.mrb[0].mxu0
        %v1378 = vadd.f32 %v1244, %v1377
        %v1379 = vpop.f32.mrb[0].mxu0
        %v1380 = vpop.f32.mrb[0].mxu0
        %v1381 = vadd.f32 %v1244, %v1380
        %v1382 = vpop.f32.mrb[0].mxu0
        %1383 = vmatprep.mubr.bf16.mxu0 0
        %1384 = vmatmul.mubr.bf16.gmra.mrb[0].mxu0 %v1284
        %v1385 = vpop.f32.mrb[0].mxu0
        %v1386 = vadd.f32 %v1244, %v1385
        %v1387 = vpop.f32.mrb[0].mxu0
        %v1388 = vpop.f32.mrb[0].mxu0
        %v1389 = vadd.f32 %v1244, %v1388
        %v1390 = vpop.f32.mrb[0].mxu0
        %1391 = vmatprep.mubr.bf16.mxu0 0
        %1392 = vmatmul.mubr.bf16.gmra.mrb[0].mxu0 %v1287
        %v1393 = vpop.f32.mrb[0].mxu0
        %v1394 = vadd.f32 %v1244, %v1393
        %v1395 = vpop.f32.mrb[0].mxu0
        %v1396 = vpop.f32.mrb[0].mxu0
        %v1397 = vadd.f32 %v1244, %v1396
        %v1398 = vpop.f32.mrb[0].mxu0
        %1399 = vmatprep.mubr.bf16.mxu0 0
        %1400 = vmatmul.mubr.bf16.gmra.mrb[0].mxu0 %v1290
        %v1401 = vpop.f32.mrb[0].mxu0
        %v1402 = vadd.f32 %v1244, %v1401
        %v1403 = vpop.f32.mrb[0].mxu0
        %v1404 = vpop.f32.mrb[0].mxu0
        %v1405 = vadd.f32 %v1244, %v1404
        %v1406 = vpop.f32.mrb[0].mxu0
        %1407 = vmatprep.mubr.bf16.mxu0 0
        %1408 = vmatmul.mubr.bf16.gmra.mrb[0].mxu0 %v1293
        %v1409 = vpop.f32.mrb[0].mxu0
        %v1410 = vadd.f32 %v1244, %v1409
        %v1411 = vpop.f32.mrb[0].mxu0
        %v1412 = vpop.f32.mrb[0].mxu0
        %v1413 = vadd.f32 %v1244, %v1412
        %v1414 = vpop.f32.mrb[0].mxu0
        %1415 = vmatprep.mubr.bf16.mxu0 0
        %1416 = vmatmul.mubr.bf16.gmra.mrb[0].mxu0 %v1296
        %v1417 = vpop.f32.mrb[0].mxu0
        %v1418 = vadd.f32 %v1244, %v1417
        %v1419 = vpop.f32.mrb[0].mxu0
        %v1420 = vpop.f32.mrb[0].mxu0
        %v1421 = vadd.f32 %v1244, %v1420
        %v1422 = vpop.f32.mrb[0].mxu0
        %1423 = vmatprep.mubr.bf16.mxu0 0
        %1424 = vmatmul.mubr.bf16.gmra.mrb[0].mxu0 %v1299
        %v1425 = vpop.f32.mrb[0].mxu0
        %v1426 = vadd.f32 %v1244, %v1425
        %v1427 = vpop.f32.mrb[0].mxu0
        %v1428 = vpop.f32.mrb[0].mxu0
        %v1429 = vadd.f32 %v1244, %v1428
        %v1430 = vpop.f32.mrb[0].mxu0
        %1431 = vmatprep.mubr.bf16.mxu0 0
        %1432 = vmatmul.mubr.bf16.gmra.mrb[0].mxu0 %v1302
        %v1433 = vpop.f32.mrb[0].mxu0
        %v1434 = vadd.f32 %v1244, %v1433
        %v1435 = vpop.f32.mrb[0].mxu0
        %v1436 = vpop.f32.mrb[0].mxu0
        %v1437 = vadd.f32 %v1244, %v1436
        %v1438 = vpop.f32.mrb[0].mxu0
        %1439 = vmatprep.mubr.bf16.mxu0 0
        %1440 = vmatmul.mubr.bf16.gmra.mrb[0].mxu0 %v1305
        %v1441 = vpop.f32.mrb[0].mxu0
        %v1442 = vadd.f32 %v1244, %v1441
        %v1443 = vpop.f32.mrb[0].mxu0
        %v1444 = vpop.f32.mrb[0].mxu0
        %v1445 = vadd.f32 %v1244, %v1444
        %v1446 = vpop.f32.mrb[0].mxu0
        %1447 = vmatprep.mubr.bf16.mxu0 0
        %1448 = vmatmul.mubr.bf16.gmra.mrb[0].mxu0 %v1308
        %v1449 = vpop.f32.mrb[0].mxu0
        %v1450 = vadd.f32 %v1244, %v1449
        %v1451 = vpop.f32.mrb[0].mxu0
        %v1452 = vpop.f32.mrb[0].mxu0
        %v1453 = vadd.f32 %v1244, %v1452
        %v1454 = vpop.f32.mrb[0].mxu0
        %1455 = vmatprep.mubr.bf16.mxu0 0
        %1456 = vmatmul.mubr.bf16.gmra.mrb[0].mxu0 %v1311
        %v1457 = vpop.f32.mrb[0].mxu0
        %v1458 = vadd.f32 %v1244, %v1457
        %v1459 = vpop.f32.mrb[0].mxu0
        %v1460 = vpop.f32.mrb[0].mxu0
        %v1461 = vadd.f32 %v1244, %v1460
        %v1462 = vpop.f32.mrb[0].mxu0
        %1463 = vmatprep.mubr.bf16.mxu0 0
        %1464 = vmatmul.mubr.bf16.gmra.mrb[0].mxu0 %v1314
        %v1465 = vpop.f32.mrb[0].mxu0
        %v1466 = vadd.f32 %v1244, %v1465
        %v1467 = vpop.f32.mrb[0].mxu0
        %v1468 = vpop.f32.mrb[0].mxu0
        %v1469 = vadd.f32 %v1244, %v1468
        %v1470 = vpop.f32.mrb[0].mxu0
        %1471 = vmatprep.mubr.bf16.mxu0 0
        %1472 = vmatmul.mubr.bf16.gmra.mrb[0].mxu0 %v1317
        %v1473 = vpop.f32.mrb[0].mxu0
        %v1474 = vadd.f32 %v1244, %v1473
        %v1475 = vpop.f32.mrb[0].mxu0
        %v1476 = vpop.f32.mrb[0].mxu0
        %v1477 = vadd.f32 %v1244, %v1476
        %v1478 = vpop.f32.mrb[0].mxu0
        %1479 = vdwg.mxu0
        %v1480 = vmax.f32 %v1354, 0.0
        %v1481 = vmax.f32 %v1357, 0.0
        %v1482 = vmax.f32 %v1362, 0.0
        %v1483 = vmax.f32 %v1365, 0.0
        %v1484 = vmax.f32 %v1370, 0.0
        %v1485 = vmax.f32 %v1373, 0.0
        %v1486 = vmax.f32 %v1378, 0.0
        %v1487 = vmax.f32 %v1381, 0.0
        %v1488 = vmax.f32 %v1386, 0.0
        %v1489 = vmax.f32 %v1389, 0.0
        %v1490 = vmax.f32 %v1394, 0.0
        %v1491 = vmax.f32 %v1397, 0.0
        %v1492 = vmax.f32 %v1402, 0.0
        %v1493 = vmax.f32 %v1405, 0.0
        %v1494 = vmax.f32 %v1410, 0.0
        %v1495 = vmax.f32 %v1413, 0.0
        %v1496 = vmax.f32 %v1418, 0.0
        %v1497 = vmax.f32 %v1421, 0.0
        %v1498 = vmax.f32 %v1426, 0.0
        %v1499 = vmax.f32 %v1429, 0.0
        %v1500 = vmax.f32 %v1434, 0.0
        %v1501 = vmax.f32 %v1437, 0.0
        %v1502 = vmax.f32 %v1442, 0.0
        %v1503 = vmax.f32 %v1445, 0.0
        %v1504 = vmax.f32 %v1450, 0.0
        %v1505 = vmax.f32 %v1453, 0.0
        %v1506 = vmax.f32 %v1458, 0.0
        %v1507 = vmax.f32 %v1461, 0.0
        %v1508 = vmax.f32 %v1466, 0.0
        %v1509 = vmax.f32 %v1469, 0.0
        %v1510 = vmax.f32 %v1474, 0.0
        %v1511 = vmax.f32 %v1477, 0.0
        %v1512 = vpack.c.bf16 %v1481, %v1480
        %v1513 = vpack.c.bf16 %v1483, %v1482
        %v1514 = vpack.c.bf16 %v1485, %v1484
        %v1515 = vpack.c.bf16 %v1487, %v1486
        %v1516 = vpack.c.bf16 %v1489, %v1488
        %v1517 = vpack.c.bf16 %v1491, %v1490
        %v1518 = vpack.c.bf16 %v1493, %v1492
        %v1519 = vpack.c.bf16 %v1495, %v1494
        %v1520 = vpack.c.bf16 %v1497, %v1496
        %v1521 = vpack.c.bf16 %v1499, %v1498
        %v1522 = vpack.c.bf16 %v1501, %v1500
        %v1523 = vpack.c.bf16 %v1503, %v1502
        %v1524 = vpack.c.bf16 %v1505, %v1504
        %v1525 = vpack.c.bf16 %v1507, %v1506
        %v1526 = vpack.c.bf16 %v1509, %v1508
        %v1527 = vpack.c.bf16 %v1511, %v1510
        %v1528 = vld [vmem:[%s5] sm:$0xff]
        %v1529 = vld [vmem:[%s5 + $0x8] sm:$0xff]
        %v1530 = vld [vmem:[%s5 + $0x10] sm:$0xff]
        %v1531 = vld [vmem:[%s5 + $0x18] sm:$0xff]
        %v1532 = vld [vmem:[%s5 + $0x20] sm:$0xff]
        %v1533 = vld [vmem:[%s5 + $0x28] sm:$0xff]
        %v1534 = vld [vmem:[%s5 + $0x30] sm:$0xff]
        %v1535 = vld [vmem:[%s5 + $0x38] sm:$0xff]
        %v1536 = vld [vmem:[%s5 + $0x40] sm:$0xff]
        %v1537 = vld [vmem:[%s5 + $0x48] sm:$0xff]
        %v1538 = vld [vmem:[%s5 + $0x50] sm:$0xff]
        %v1539 = vld [vmem:[%s5 + $0x58] sm:$0xff]
        %v1540 = vld [vmem:[%s5 + $0x60] sm:$0xff]
        %v1541 = vld [vmem:[%s5 + $0x68] sm:$0xff]
        %v1542 = vld [vmem:[%s5 + $0x70] sm:$0xff]
        %v1543 = vld [vmem:[%s5 + $0x78] sm:$0xff]
        %v1544 = vld [vmem:[%s6] sm:$0x3]
        %v1546 = vlaneseq
        %v1547 = vshrl.u32 %v1546, 7
        %v1548 = vsub.s32 0, %v1547
        %v1549 = vrot.slane %v1544, %v1548
        %v1550 = vlaneseq
        %v1551 = vshrl.u32 %v1550, 7
        %v1552 = vsub.s32 1, %v1551
        %v1553 = vrot.slane %v1544, %v1552
        %v1572 = vunpack.c.l.b16 %v1528
        %v1573 = vunpack.c.h.b16 %v1528
        %v1574 = vunpack.c.l.b16 %v1529
        %v1575 = vunpack.c.h.b16 %v1529
        %v1576 = vunpack.c.l.b16 %v1530
        %v1577 = vunpack.c.h.b16 %v1530
        %v1578 = vunpack.c.l.b16 %v1531
        %v1579 = vunpack.c.h.b16 %v1531
        %v1580 = vunpack.c.l.b16 %v1532
        %v1581 = vunpack.c.h.b16 %v1532
        %v1582 = vunpack.c.l.b16 %v1533
        %v1583 = vunpack.c.h.b16 %v1533
        %v1584 = vunpack.c.l.b16 %v1534
        %v1585 = vunpack.c.h.b16 %v1534
        %v1586 = vunpack.c.l.b16 %v1535
        %v1587 = vunpack.c.h.b16 %v1535
        %v1588 = vunpack.c.l.b16 %v1536
        %v1589 = vunpack.c.h.b16 %v1536
        %v1590 = vunpack.c.l.b16 %v1537
        %v1591 = vunpack.c.h.b16 %v1537
        %v1592 = vunpack.c.l.b16 %v1538
        %v1593 = vunpack.c.h.b16 %v1538
        %v1594 = vunpack.c.l.b16 %v1539
        %v1595 = vunpack.c.h.b16 %v1539
        %v1596 = vunpack.c.l.b16 %v1540
        %v1597 = vunpack.c.h.b16 %v1540
        %v1598 = vunpack.c.l.b16 %v1541
        %v1599 = vunpack.c.h.b16 %v1541
        %v1600 = vunpack.c.l.b16 %v1542
        %v1601 = vunpack.c.h.b16 %v1542
        %v1602 = vunpack.c.l.b16 %v1543
        %v1603 = vunpack.c.h.b16 %v1543
        %v1604 = vpack.c.b16 %v1574, %v1572
        %v1605 = vpack.c.b16 %v1575, %v1573
        %v1606 = vpack.c.b16 %v1578, %v1576
        %v1607 = vpack.c.b16 %v1579, %v1577
        %v1608 = vpack.c.b16 %v1582, %v1580
        %v1609 = vpack.c.b16 %v1583, %v1581
        %v1610 = vpack.c.b16 %v1586, %v1584
        %v1611 = vpack.c.b16 %v1587, %v1585
        %v1612 = vpack.c.b16 %v1590, %v1588
        %v1613 = vpack.c.b16 %v1591, %v1589
        %v1614 = vpack.c.b16 %v1594, %v1592
        %v1615 = vpack.c.b16 %v1595, %v1593
        %v1616 = vpack.c.b16 %v1598, %v1596
        %v1617 = vpack.c.b16 %v1599, %v1597
        %v1618 = vpack.c.b16 %v1602, %v1600
        %v1619 = vpack.c.b16 %v1603, %v1601
        %1636 = vmatprep.subr.bf16.mxu0 %v1605
        %1637 = vmatpush1.bf16.msra.mxu0 %v1604
        %1638 = vmatprep.subr.bf16.mxu0 %v1607
        %1639 = vmatpush1.bf16.msra.mxu0 %v1606
        %1640 = vmatprep.subr.bf16.mxu0 %v1609
        %1641 = vmatpush1.bf16.msra.mxu0 %v1608
        %1642 = vmatprep.subr.bf16.mxu0 %v1611
        %1643 = vmatpush1.bf16.msra.mxu0 %v1610
        %1644 = vmatprep.subr.bf16.mxu0 %v1613
        %1645 = vmatpush1.bf16.msra.mxu0 %v1612
        %1646 = vmatprep.subr.bf16.mxu0 %v1615
        %1647 = vmatpush1.bf16.msra.mxu0 %v1614
        %1648 = vmatprep.subr.bf16.mxu0 %v1617
        %1649 = vmatpush1.bf16.msra.mxu0 %v1616
        %1650 = vmatprep.subr.bf16.mxu0 %v1619
        %1651 = vmatpush1.bf16.msra.mxu0 %v1618
        %1652 = vmatprep.subr.bf16.mxu0 0
        %1653 = vmatpush1.bf16.msra.mxu0 0
        %1654 = vmatprep.subr.bf16.mxu0 0
        %1655 = vmatpush1.bf16.msra.mxu0 0
        %1656 = vmatprep.subr.bf16.mxu0 0
        %1657 = vmatpush1.bf16.msra.mxu0 0
        %1658 = vmatprep.subr.bf16.mxu0 0
        %1659 = vmatpush1.bf16.msra.mxu0 0
        %1660 = vmatprep.subr.bf16.mxu0 0
        %1661 = vmatpush1.bf16.msra.mxu0 0
        %1662 = vmatprep.subr.bf16.mxu0 0
        %1663 = vmatpush1.bf16.msra.mxu0 0
        %1664 = vmatprep.subr.bf16.mxu0 0
        %1665 = vmatpush1.bf16.msra.mxu0 0
        %1666 = vmatprep.subr.bf16.mxu0 0
        %1667 = vmatpush1.bf16.msra.mxu0 0
        %1668 = vmatprep.mubr.bf16.mxu0 0
        %1669 = vmatmul.mubr.bf16.gmra.mrb[0].mxu0 %v1512
        %v1670 = vpop.f32.mrb[0].mxu0
        %v1671 = vadd.f32 %v1549, %v1670
        %v1672 = vpop.f32.mrb[0].mxu0
        %v1673 = vadd.f32 %v1553, %v1672
        %v1674 = vpop.f32.mrb[0].mxu0
        %v1675 = vadd.f32 %v1549, %v1674
        %v1676 = vpop.f32.mrb[0].mxu0
        %v1677 = vadd.f32 %v1553, %v1676
        %1678 = vmatprep.mubr.bf16.mxu0 0
        %1679 = vmatmul.mubr.bf16.gmra.mrb[0].mxu0 %v1513
        %v1680 = vpop.f32.mrb[0].mxu0
        %v1681 = vadd.f32 %v1549, %v1680
        %v1682 = vpop.f32.mrb[0].mxu0
        %v1683 = vadd.f32 %v1553, %v1682
        %v1684 = vpop.f32.mrb[0].mxu0
        %v1685 = vadd.f32 %v1549, %v1684
        %v1686 = vpop.f32.mrb[0].mxu0
        %v1687 = vadd.f32 %v1553, %v1686
        %1688 = vmatprep.mubr.bf16.mxu0 0
        %1689 = vmatmul.mubr.bf16.gmra.mrb[0].mxu0 %v1514
        %v1690 = vpop.f32.mrb[0].mxu0
        %v1691 = vadd.f32 %v1549, %v1690
        %v1692 = vpop.f32.mrb[0].mxu0
        %v1693 = vadd.f32 %v1553, %v1692
        %v1694 = vpop.f32.mrb[0].mxu0
        %v1695 = vadd.f32 %v1549, %v1694
        %v1696 = vpop.f32.mrb[0].mxu0
        %v1697 = vadd.f32 %v1553, %v1696
        %1698 = vmatprep.mubr.bf16.mxu0 0
        %1699 = vmatmul.mubr.bf16.gmra.mrb[0].mxu0 %v1515
        %v1700 = vpop.f32.mrb[0].mxu0
        %v1701 = vadd.f32 %v1549, %v1700
        %v1702 = vpop.f32.mrb[0].mxu0
        %v1703 = vadd.f32 %v1553, %v1702
        %v1704 = vpop.f32.mrb[0].mxu0
        %v1705 = vadd.f32 %v1549, %v1704
        %v1706 = vpop.f32.mrb[0].mxu0
        %v1707 = vadd.f32 %v1553, %v1706
        %1708 = vmatprep.mubr.bf16.mxu0 0
        %1709 = vmatmul.mubr.bf16.gmra.mrb[0].mxu0 %v1516
        %v1710 = vpop.f32.mrb[0].mxu0
        %v1711 = vadd.f32 %v1549, %v1710
        %v1712 = vpop.f32.mrb[0].mxu0
        %v1713 = vadd.f32 %v1553, %v1712
        %v1714 = vpop.f32.mrb[0].mxu0
        %v1715 = vadd.f32 %v1549, %v1714
        %v1716 = vpop.f32.mrb[0].mxu0
        %v1717 = vadd.f32 %v1553, %v1716
        %1718 = vmatprep.mubr.bf16.mxu0 0
        %1719 = vmatmul.mubr.bf16.gmra.mrb[0].mxu0 %v1517
        %v1720 = vpop.f32.mrb[0].mxu0
        %v1721 = vadd.f32 %v1549, %v1720
        %v1722 = vpop.f32.mrb[0].mxu0
        %v1723 = vadd.f32 %v1553, %v1722
        %v1724 = vpop.f32.mrb[0].mxu0
        %v1725 = vadd.f32 %v1549, %v1724
        %v1726 = vpop.f32.mrb[0].mxu0
        %v1727 = vadd.f32 %v1553, %v1726
        %1728 = vmatprep.mubr.bf16.mxu0 0
        %1729 = vmatmul.mubr.bf16.gmra.mrb[0].mxu0 %v1518
        %v1730 = vpop.f32.mrb[0].mxu0
        %v1731 = vadd.f32 %v1549, %v1730
        %v1732 = vpop.f32.mrb[0].mxu0
        %v1733 = vadd.f32 %v1553, %v1732
        %v1734 = vpop.f32.mrb[0].mxu0
        %v1735 = vadd.f32 %v1549, %v1734
        %v1736 = vpop.f32.mrb[0].mxu0
        %v1737 = vadd.f32 %v1553, %v1736
        %1738 = vmatprep.mubr.bf16.mxu0 0
        %1739 = vmatmul.mubr.bf16.gmra.mrb[0].mxu0 %v1519
        %v1740 = vpop.f32.mrb[0].mxu0
        %v1741 = vadd.f32 %v1549, %v1740
        %v1742 = vpop.f32.mrb[0].mxu0
        %v1743 = vadd.f32 %v1553, %v1742
        %v1744 = vpop.f32.mrb[0].mxu0
        %v1745 = vadd.f32 %v1549, %v1744
        %v1746 = vpop.f32.mrb[0].mxu0
        %v1747 = vadd.f32 %v1553, %v1746
        %1748 = vmatprep.mubr.bf16.mxu0 0
        %1749 = vmatmul.mubr.bf16.gmra.mrb[0].mxu0 %v1520
        %v1750 = vpop.f32.mrb[0].mxu0
        %v1751 = vadd.f32 %v1549, %v1750
        %v1752 = vpop.f32.mrb[0].mxu0
        %v1753 = vadd.f32 %v1553, %v1752
        %v1754 = vpop.f32.mrb[0].mxu0
        %v1755 = vadd.f32 %v1549, %v1754
        %v1756 = vpop.f32.mrb[0].mxu0
        %v1757 = vadd.f32 %v1553, %v1756
        %1758 = vmatprep.mubr.bf16.mxu0 0
        %1759 = vmatmul.mubr.bf16.gmra.mrb[0].mxu0 %v1521
        %v1760 = vpop.f32.mrb[0].mxu0
        %v1761 = vadd.f32 %v1549, %v1760
        %v1762 = vpop.f32.mrb[0].mxu0
        %v1763 = vadd.f32 %v1553, %v1762
        %v1764 = vpop.f32.mrb[0].mxu0
        %v1765 = vadd.f32 %v1549, %v1764
        %v1766 = vpop.f32.mrb[0].mxu0
        %v1767 = vadd.f32 %v1553, %v1766
        %1768 = vmatprep.mubr.bf16.mxu0 0
        %1769 = vmatmul.mubr.bf16.gmra.mrb[0].mxu0 %v1522
        %v1770 = vpop.f32.mrb[0].mxu0
        %v1771 = vadd.f32 %v1549, %v1770
        %v1772 = vpop.f32.mrb[0].mxu0
        %v1773 = vadd.f32 %v1553, %v1772
        %v1774 = vpop.f32.mrb[0].mxu0
        %v1775 = vadd.f32 %v1549, %v1774
        %v1776 = vpop.f32.mrb[0].mxu0
        %v1777 = vadd.f32 %v1553, %v1776
        %1778 = vmatprep.mubr.bf16.mxu0 0
        %1779 = vmatmul.mubr.bf16.gmra.mrb[0].mxu0 %v1523
        %v1780 = vpop.f32.mrb[0].mxu0
        %v1781 = vadd.f32 %v1549, %v1780
        %v1782 = vpop.f32.mrb[0].mxu0
        %v1783 = vadd.f32 %v1553, %v1782
        %v1784 = vpop.f32.mrb[0].mxu0
        %v1785 = vadd.f32 %v1549, %v1784
        %v1786 = vpop.f32.mrb[0].mxu0
        %v1787 = vadd.f32 %v1553, %v1786
        %1788 = vmatprep.mubr.bf16.mxu0 0
        %1789 = vmatmul.mubr.bf16.gmra.mrb[0].mxu0 %v1524
        %v1790 = vpop.f32.mrb[0].mxu0
        %v1791 = vadd.f32 %v1549, %v1790
        %v1792 = vpop.f32.mrb[0].mxu0
        %v1793 = vadd.f32 %v1553, %v1792
        %v1794 = vpop.f32.mrb[0].mxu0
        %v1795 = vadd.f32 %v1549, %v1794
        %v1796 = vpop.f32.mrb[0].mxu0
        %v1797 = vadd.f32 %v1553, %v1796
        %1798 = vmatprep.mubr.bf16.mxu0 0
        %1799 = vmatmul.mubr.bf16.gmra.mrb[0].mxu0 %v1525
        %v1800 = vpop.f32.mrb[0].mxu0
        %v1801 = vadd.f32 %v1549, %v1800
        %v1802 = vpop.f32.mrb[0].mxu0
        %v1803 = vadd.f32 %v1553, %v1802
        %v1804 = vpop.f32.mrb[0].mxu0
        %v1805 = vadd.f32 %v1549, %v1804
        %v1806 = vpop.f32.mrb[0].mxu0
        %v1807 = vadd.f32 %v1553, %v1806
        %1808 = vmatprep.mubr.bf16.mxu0 0
        %1809 = vmatmul.mubr.bf16.gmra.mrb[0].mxu0 %v1526
        %v1810 = vpop.f32.mrb[0].mxu0
        %v1811 = vadd.f32 %v1549, %v1810
        %v1812 = vpop.f32.mrb[0].mxu0
        %v1813 = vadd.f32 %v1553, %v1812
        %v1814 = vpop.f32.mrb[0].mxu0
        %v1815 = vadd.f32 %v1549, %v1814
        %v1816 = vpop.f32.mrb[0].mxu0
        %v1817 = vadd.f32 %v1553, %v1816
        %1818 = vmatprep.mubr.bf16.mxu0 0
        %1819 = vmatmul.mubr.bf16.gmra.mrb[0].mxu0 %v1527
        %v1820 = vpop.f32.mrb[0].mxu0
        %v1821 = vadd.f32 %v1549, %v1820
        %v1822 = vpop.f32.mrb[0].mxu0
        %v1823 = vadd.f32 %v1553, %v1822
        %v1824 = vpop.f32.mrb[0].mxu0
        %v1825 = vadd.f32 %v1549, %v1824
        %v1826 = vpop.f32.mrb[0].mxu0
        %v1827 = vadd.f32 %v1553, %v1826
        %1828 = vdwg.mxu0
        %v1829 = vmax.f32 %v1671, 0.0
        %v1830 = vmax.f32 %v1673, 0.0
        %v1831 = vmax.f32 %v1675, 0.0
        %v1832 = vmax.f32 %v1677, 0.0
        %v1833 = vmax.f32 %v1681, 0.0
        %v1834 = vmax.f32 %v1683, 0.0
        %v1835 = vmax.f32 %v1685, 0.0
        %v1836 = vmax.f32 %v1687, 0.0
        %v1837 = vmax.f32 %v1691, 0.0
        %v1838 = vmax.f32 %v1693, 0.0
        %v1839 = vmax.f32 %v1695, 0.0
        %v1840 = vmax.f32 %v1697, 0.0
        %v1841 = vmax.f32 %v1701, 0.0
        %v1842 = vmax.f32 %v1703, 0.0
        %v1843 = vmax.f32 %v1705, 0.0
        %v1844 = vmax.f32 %v1707, 0.0
        %v1845 = vmax.f32 %v1711, 0.0
        %v1846 = vmax.f32 %v1713, 0.0
        %v1847 = vmax.f32 %v1715, 0.0
        %v1848 = vmax.f32 %v1717, 0.0
        %v1849 = vmax.f32 %v1721, 0.0
        %v1850 = vmax.f32 %v1723, 0.0
        %v1851 = vmax.f32 %v1725, 0.0
        %v1852 = vmax.f32 %v1727, 0.0
        %v1853 = vmax.f32 %v1731, 0.0
        %v1854 = vmax.f32 %v1733, 0.0
        %v1855 = vmax.f32 %v1735, 0.0
        %v1856 = vmax.f32 %v1737, 0.0
        %v1857 = vmax.f32 %v1741, 0.0
        %v1858 = vmax.f32 %v1743, 0.0
        %v1859 = vmax.f32 %v1745, 0.0
        %v1860 = vmax.f32 %v1747, 0.0
        %v1861 = vmax.f32 %v1751, 0.0
        %v1862 = vmax.f32 %v1753, 0.0
        %v1863 = vmax.f32 %v1755, 0.0
        %v1864 = vmax.f32 %v1757, 0.0
        %v1865 = vmax.f32 %v1761, 0.0
        %v1866 = vmax.f32 %v1763, 0.0
        %v1867 = vmax.f32 %v1765, 0.0
        %v1868 = vmax.f32 %v1767, 0.0
        %v1869 = vmax.f32 %v1771, 0.0
        %v1870 = vmax.f32 %v1773, 0.0
        %v1871 = vmax.f32 %v1775, 0.0
        %v1872 = vmax.f32 %v1777, 0.0
        %v1873 = vmax.f32 %v1781, 0.0
        %v1874 = vmax.f32 %v1783, 0.0
        %v1875 = vmax.f32 %v1785, 0.0
        %v1876 = vmax.f32 %v1787, 0.0
        %v1877 = vmax.f32 %v1791, 0.0
        %v1878 = vmax.f32 %v1793, 0.0
        %v1879 = vmax.f32 %v1795, 0.0
        %v1880 = vmax.f32 %v1797, 0.0
        %v1881 = vmax.f32 %v1801, 0.0
        %v1882 = vmax.f32 %v1803, 0.0
        %v1883 = vmax.f32 %v1805, 0.0
        %v1884 = vmax.f32 %v1807, 0.0
        %v1885 = vmax.f32 %v1811, 0.0
        %v1886 = vmax.f32 %v1813, 0.0
        %v1887 = vmax.f32 %v1815, 0.0
        %v1888 = vmax.f32 %v1817, 0.0
        %v1889 = vmax.f32 %v1821, 0.0
        %v1890 = vmax.f32 %v1823, 0.0
        %v1891 = vmax.f32 %v1825, 0.0
        %v1892 = vmax.f32 %v1827, 0.0
        %v1893 = vld [vmem:[#allocation2] sm:$0xf]
        %v1894 = vmax.f32 %v1829, %v1831
        %v1895 = vmax.f32 %v1894, %v1833
        %v1896 = vmax.f32 %v1895, %v1835
        %v1897 = vmax.f32 %v1896, %v1837
        %v1898 = vmax.f32 %v1897, %v1839
        %v1899 = vmax.f32 %v1898, %v1841
        %v1900 = vmax.f32 %v1899, %v1843
        %v1901 = vmax.f32 %v1900, %v1845
        %v1902 = vmax.f32 %v1901, %v1847
        %v1903 = vmax.f32 %v1902, %v1849
        %v1904 = vmax.f32 %v1903, %v1851
        %v1905 = vmax.f32 %v1904, %v1853
        %v1906 = vmax.f32 %v1905, %v1855
        %v1907 = vmax.f32 %v1906, %v1857
        %v1908 = vmax.f32 %v1907, %v1859
        %v1909 = vrot.slane %v1908, 4
        %v1910 = vmax.f32 %v1908, %v1909
        %v1911 = vrot.slane %v1910, 2
        %v1912 = vmax.f32 %v1910, %v1911
        %v1913 = vrot.slane %v1912, 1
        %v1914 = vmax.f32 %v1912, %v1913
        %v1915 = vmax.f32 %v1830, %v1832
        %v1916 = vmax.f32 %v1915, %v1834
        %v1917 = vmax.f32 %v1916, %v1836
        %v1918 = vmax.f32 %v1917, %v1838
        %v1919 = vmax.f32 %v1918, %v1840
        %v1920 = vmax.f32 %v1919, %v1842
        %v1921 = vmax.f32 %v1920, %v1844
        %v1922 = vmax.f32 %v1921, %v1846
        %v1923 = vmax.f32 %v1922, %v1848
        %v1924 = vmax.f32 %v1923, %v1850
        %v1925 = vmax.f32 %v1924, %v1852
        %v1926 = vmax.f32 %v1925, %v1854
        %v1927 = vmax.f32 %v1926, %v1856
        %v1928 = vmax.f32 %v1927, %v1858
        %v1929 = vmax.f32 %v1928, %v1860
        %v1930 = vrot.slane %v1929, 4
        %v1931 = vmax.f32 %v1929, %v1930
        %v1932 = vrot.slane %v1931, 2
        %v1933 = vmax.f32 %v1931, %v1932
        %v1934 = vrot.slane %v1933, 1
        %v1935 = vmax.f32 %v1933, %v1934
        %v1936 = vmax.f32 %v1861, %v1863
        %v1937 = vmax.f32 %v1936, %v1865
        %v1938 = vmax.f32 %v1937, %v1867
        %v1939 = vmax.f32 %v1938, %v1869
        %v1940 = vmax.f32 %v1939, %v1871
        %v1941 = vmax.f32 %v1940, %v1873
        %v1942 = vmax.f32 %v1941, %v1875
        %v1943 = vmax.f32 %v1942, %v1877
        %v1944 = vmax.f32 %v1943, %v1879
        %v1945 = vmax.f32 %v1944, %v1881
        %v1946 = vmax.f32 %v1945, %v1883
        %v1947 = vmax.f32 %v1946, %v1885
        %v1948 = vmax.f32 %v1947, %v1887
        %v1949 = vmax.f32 %v1948, %v1889
        %v1950 = vmax.f32 %v1949, %v1891
        %v1951 = vrot.slane %v1950, 4
        %v1952 = vmax.f32 %v1950, %v1951
        %v1953 = vrot.slane %v1952, 2
        %v1954 = vmax.f32 %v1952, %v1953
        %v1955 = vrot.slane %v1954, 1
        %v1956 = vmax.f32 %v1954, %v1955
        %v1957 = vmax.f32 %v1862, %v1864
        %v1958 = vmax.f32 %v1957, %v1866
        %v1959 = vmax.f32 %v1958, %v1868
        %v1960 = vmax.f32 %v1959, %v1870
        %v1961 = vmax.f32 %v1960, %v1872
        %v1962 = vmax.f32 %v1961, %v1874
        %v1963 = vmax.f32 %v1962, %v1876
        %v1964 = vmax.f32 %v1963, %v1878
        %v1965 = vmax.f32 %v1964, %v1880
        %v1966 = vmax.f32 %v1965, %v1882
        %v1967 = vmax.f32 %v1966, %v1884
        %v1968 = vmax.f32 %v1967, %v1886
        %v1969 = vmax.f32 %v1968, %v1888
        %v1970 = vmax.f32 %v1969, %v1890
        %v1971 = vmax.f32 %v1970, %v1892
        %v1972 = vrot.slane %v1971, 4
        %v1973 = vmax.f32 %v1971, %v1972
        %v1974 = vrot.slane %v1973, 2
        %v1975 = vmax.f32 %v1973, %v1974
        %v1976 = vrot.slane %v1975, 1
        %v1977 = vmax.f32 %v1975, %v1976
        %v1982 = vcombine.low %v1914, %v1935
        %v1984 = vunpack.c.l.s4 1983009808
        %v1985 = vunpack.c.0.s8 %v1984
        %v1986 = vlaneseq
        %v1987 = vshrl.u32 %v1986, 7
        %v1988 = vsub.s32 %v1985, %v1987
        %v1989 = vrot.slane %v1982, %v1988
        %v1990 = vcombine.low %v1956, %v1977
        %v1992 = vunpack.c.l.s4 1983009808
        %v1993 = vunpack.c.0.s8 %v1992
        %v1994 = vlaneseq
        %v1995 = vshrl.u32 %v1994, 7
        %v1996 = vsub.s32 %v1993, %v1995
        %v1997 = vrot.slane %v1990, %v1996
        %vm1998 = vcmask 1044484
        %v1999 = vsel %vm1998, %v1989, %v1989
        %vm2000 = vcmask 1046534
        %v2001 = vsel %vm2000, %v1989, %v1999
        %v2002 = vrot.slane %v1997, 7
        %vm2003 = vcmask 1041409
        %v2004 = vsel %vm2003, %v2002, %v2001
        %vm2005 = vcmask 1043459
        %v2006 = vsel %vm2005, %v2002, %v2004
        %vm2007 = vcmask 1045509
        %v2008 = vsel %vm2007, %v2002, %v2006
        %vm2009 = vcmask 1047559
        %v2010 = vsel %vm2009, %v2002, %v2008
        %v2012 = vmax.f32 %v1893, %v2010
        %2013 = vst [vmem:[#allocation2] sm:$0xf] %v2012
        %p2014 = scmp.eq.s32.totalorder %s27, 2
        // Predicated region
        $region103: #{tpu_custom_call.1} parent=89 // pred_check
          %p2015 = pneg %p2014
        $region104: #{tpu_custom_call.1} parent=89 // pred_check_branch
          %2017 = sbr.rel (%p2015) target = $region106
        $region105: #{tpu_custom_call.1} parent=89 // pred_region
          %v2018 = vld [vmem:[#allocation2] sm:$0xf]
          %v2021 = vunpack.c.l.s4 1983009808
          %v2022 = vunpack.c.0.s8 %v2021
          %v2023 = vlaneseq
          %v2024 = vshrl.u32 %v2023, 7
          %v2025 = vsub.s32 %v2022, %v2024
          %v2026 = vrot.slane %v2018, %v2025
          %v2027 = vcombine.high %v2026, %v2026
          %v2030 = vpack.c.bf16 %v2026, %v2026
          %v2031 = vpack.c.bf16 %v2027, %v2027
          %v2032 = vld [vmem:[#allocation4] sm:$0xff]
          %v2033 = vld [vmem:[#allocation4 + $0x8] sm:$0xff]
          %v2034 = vld [vmem:[#allocation4 + $0x10] sm:$0xff]
          %v2035 = vld [vmem:[#allocation4 + $0x18] sm:$0xff]
          %v2036 = vld [vmem:[#allocation4 + $0x20] sm:$0xff]
          %v2037 = vld [vmem:[#allocation4 + $0x28] sm:$0xff]
          %v2038 = vld [vmem:[#allocation4 + $0x30] sm:$0xff]
          %v2039 = vld [vmem:[#allocation4 + $0x38] sm:$0xff]
          %v2040 = vld [vmem:[#allocation4 + $0x40] sm:$0xff]
          %v2041 = vld [vmem:[#allocation4 + $0x48] sm:$0xff]
          %v2042 = vld [vmem:[#allocation4 + $0x50] sm:$0xff]
          %v2043 = vld [vmem:[#allocation4 + $0x58] sm:$0xff]
          %v2044 = vld [vmem:[#allocation4 + $0x60] sm:$0xff]
          %v2045 = vld [vmem:[#allocation4 + $0x68] sm:$0xff]
          %v2046 = vld [vmem:[#allocation4 + $0x70] sm:$0xff]
          %v2047 = vld [vmem:[#allocation4 + $0x78] sm:$0xff]
          %v2048 = vld [vmem:[#allocation4 + $0x80] sm:$0xff]
          %v2049 = vld [vmem:[#allocation4 + $0x88] sm:$0xff]
          %v2050 = vld [vmem:[#allocation4 + $0x90] sm:$0xff]
          %v2051 = vld [vmem:[#allocation4 + $0x98] sm:$0xff]
          %v2052 = vld [vmem:[#allocation4 + $0xa0] sm:$0xff]
          %v2053 = vld [vmem:[#allocation4 + $0xa8] sm:$0xff]
          %v2054 = vld [vmem:[#allocation4 + $0xb0] sm:$0xff]
          %v2055 = vld [vmem:[#allocation4 + $0xb8] sm:$0xff]
          %v2056 = vld [vmem:[#allocation4 + $0xc0] sm:$0xff]
          %v2057 = vld [vmem:[#allocation4 + $0xc8] sm:$0xff]
          %v2058 = vld [vmem:[#allocation4 + $0xd0] sm:$0xff]
          %v2059 = vld [vmem:[#allocation4 + $0xd8] sm:$0xff]
          %v2060 = vld [vmem:[#allocation4 + $0xe0] sm:$0xff]
          %v2061 = vld [vmem:[#allocation4 + $0xe8] sm:$0xff]
          %v2062 = vld [vmem:[#allocation4 + $0xf0] sm:$0xff]
          %v2063 = vld [vmem:[#allocation4 + $0xf8] sm:$0xff]
          %v2064 = vld [vmem:[#allocation4 + $0x100] sm:$0xff]
          %v2065 = vld [vmem:[#allocation4 + $0x108] sm:$0xff]
          %v2066 = vld [vmem:[#allocation4 + $0x110] sm:$0xff]
          %v2067 = vld [vmem:[#allocation4 + $0x118] sm:$0xff]
          %v2068 = vld [vmem:[#allocation4 + $0x120] sm:$0xff]
          %v2069 = vld [vmem:[#allocation4 + $0x128] sm:$0xff]
          %v2070 = vld [vmem:[#allocation4 + $0x130] sm:$0xff]
          %v2071 = vld [vmem:[#allocation4 + $0x138] sm:$0xff]
          %v2072 = vld [vmem:[#allocation4 + $0x140] sm:$0xff]
          %v2073 = vld [vmem:[#allocation4 + $0x148] sm:$0xff]
          %v2074 = vld [vmem:[#allocation4 + $0x150] sm:$0xff]
          %v2075 = vld [vmem:[#allocation4 + $0x158] sm:$0xff]
          %v2076 = vld [vmem:[#allocation4 + $0x160] sm:$0xff]
          %v2077 = vld [vmem:[#allocation4 + $0x168] sm:$0xff]
          %v2078 = vld [vmem:[#allocation4 + $0x170] sm:$0xff]
          %v2079 = vld [vmem:[#allocation4 + $0x178] sm:$0xff]
          %v2080 = vld [vmem:[#allocation4 + $0x180] sm:$0xff]
          %v2081 = vld [vmem:[#allocation4 + $0x188] sm:$0xff]
          %v2082 = vld [vmem:[#allocation4 + $0x190] sm:$0xff]
          %v2083 = vld [vmem:[#allocation4 + $0x198] sm:$0xff]
          %v2084 = vld [vmem:[#allocation4 + $0x1a0] sm:$0xff]
          %v2085 = vld [vmem:[#allocation4 + $0x1a8] sm:$0xff]
          %v2086 = vld [vmem:[#allocation4 + $0x1b0] sm:$0xff]
          %v2087 = vld [vmem:[#allocation4 + $0x1b8] sm:$0xff]
          %v2088 = vld [vmem:[#allocation4 + $0x1c0] sm:$0xff]
          %v2089 = vld [vmem:[#allocation4 + $0x1c8] sm:$0xff]
          %v2090 = vld [vmem:[#allocation4 + $0x1d0] sm:$0xff]
          %v2091 = vld [vmem:[#allocation4 + $0x1d8] sm:$0xff]
          %v2092 = vld [vmem:[#allocation4 + $0x1e0] sm:$0xff]
          %v2093 = vld [vmem:[#allocation4 + $0x1e8] sm:$0xff]
          %v2094 = vld [vmem:[#allocation4 + $0x1f0] sm:$0xff]
          %v2095 = vld [vmem:[#allocation4 + $0x1f8] sm:$0xff]
          %v2096 = vld [vmem:[#allocation4 + $0x200] sm:$0xff]
          %v2097 = vld [vmem:[#allocation4 + $0x208] sm:$0xff]
          %v2098 = vld [vmem:[#allocation4 + $0x210] sm:$0xff]
          %v2099 = vld [vmem:[#allocation4 + $0x218] sm:$0xff]
          %v2100 = vld [vmem:[#allocation4 + $0x220] sm:$0xff]
          %v2101 = vld [vmem:[#allocation4 + $0x228] sm:$0xff]
          %v2102 = vld [vmem:[#allocation4 + $0x230] sm:$0xff]
          %v2103 = vld [vmem:[#allocation4 + $0x238] sm:$0xff]
          %v2104 = vld [vmem:[#allocation4 + $0x240] sm:$0xff]
          %v2105 = vld [vmem:[#allocation4 + $0x248] sm:$0xff]
          %v2106 = vld [vmem:[#allocation4 + $0x250] sm:$0xff]
          %v2107 = vld [vmem:[#allocation4 + $0x258] sm:$0xff]
          %v2108 = vld [vmem:[#allocation4 + $0x260] sm:$0xff]
          %v2109 = vld [vmem:[#allocation4 + $0x268] sm:$0xff]
          %v2110 = vld [vmem:[#allocation4 + $0x270] sm:$0xff]
          %v2111 = vld [vmem:[#allocation4 + $0x278] sm:$0xff]
          %v2112 = vld [vmem:[#allocation4 + $0x280] sm:$0xff]
          %v2113 = vld [vmem:[#allocation4 + $0x288] sm:$0xff]
          %v2114 = vld [vmem:[#allocation4 + $0x290] sm:$0xff]
          %v2115 = vld [vmem:[#allocation4 + $0x298] sm:$0xff]
          %v2116 = vld [vmem:[#allocation4 + $0x2a0] sm:$0xff]
          %v2117 = vld [vmem:[#allocation4 + $0x2a8] sm:$0xff]
          %v2118 = vld [vmem:[#allocation4 + $0x2b0] sm:$0xff]
          %v2119 = vld [vmem:[#allocation4 + $0x2b8] sm:$0xff]
          %v2120 = vld [vmem:[#allocation4 + $0x2c0] sm:$0xff]
          %v2121 = vld [vmem:[#allocation4 + $0x2c8] sm:$0xff]
          %v2122 = vld [vmem:[#allocation4 + $0x2d0] sm:$0xff]
          %v2123 = vld [vmem:[#allocation4 + $0x2d8] sm:$0xff]
          %v2124 = vld [vmem:[#allocation4 + $0x2e0] sm:$0xff]
          %v2125 = vld [vmem:[#allocation4 + $0x2e8] sm:$0xff]
          %v2126 = vld [vmem:[#allocation4 + $0x2f0] sm:$0xff]
          %v2127 = vld [vmem:[#allocation4 + $0x2f8] sm:$0xff]
          %v2128 = vld [vmem:[#allocation4 + $0x300] sm:$0xff]
          %v2129 = vld [vmem:[#allocation4 + $0x308] sm:$0xff]
          %v2130 = vld [vmem:[#allocation4 + $0x310] sm:$0xff]
          %v2131 = vld [vmem:[#allocation4 + $0x318] sm:$0xff]
          %v2132 = vld [vmem:[#allocation4 + $0x320] sm:$0xff]
          %v2133 = vld [vmem:[#allocation4 + $0x328] sm:$0xff]
          %v2134 = vld [vmem:[#allocation4 + $0x330] sm:$0xff]
          %v2135 = vld [vmem:[#allocation4 + $0x338] sm:$0xff]
          %v2136 = vld [vmem:[#allocation4 + $0x340] sm:$0xff]
          %v2137 = vld [vmem:[#allocation4 + $0x348] sm:$0xff]
          %v2138 = vld [vmem:[#allocation4 + $0x350] sm:$0xff]
          %v2139 = vld [vmem:[#allocation4 + $0x358] sm:$0xff]
          %v2140 = vld [vmem:[#allocation4 + $0x360] sm:$0xff]
          %v2141 = vld [vmem:[#allocation4 + $0x368] sm:$0xff]
          %v2142 = vld [vmem:[#allocation4 + $0x370] sm:$0xff]
          %v2143 = vld [vmem:[#allocation4 + $0x378] sm:$0xff]
          %v2144 = vld [vmem:[#allocation4 + $0x380] sm:$0xff]
          %v2145 = vld [vmem:[#allocation4 + $0x388] sm:$0xff]
          %v2146 = vld [vmem:[#allocation4 + $0x390] sm:$0xff]
          %v2147 = vld [vmem:[#allocation4 + $0x398] sm:$0xff]
          %v2148 = vld [vmem:[#allocation4 + $0x3a0] sm:$0xff]
          %v2149 = vld [vmem:[#allocation4 + $0x3a8] sm:$0xff]
          %v2150 = vld [vmem:[#allocation4 + $0x3b0] sm:$0xff]
          %v2151 = vld [vmem:[#allocation4 + $0x3b8] sm:$0xff]
          %v2152 = vld [vmem:[#allocation4 + $0x3c0] sm:$0xff]
          %v2153 = vld [vmem:[#allocation4 + $0x3c8] sm:$0xff]
          %v2154 = vld [vmem:[#allocation4 + $0x3d0] sm:$0xff]
          %v2155 = vld [vmem:[#allocation4 + $0x3d8] sm:$0xff]
          %v2156 = vld [vmem:[#allocation4 + $0x3e0] sm:$0xff]
          %v2157 = vld [vmem:[#allocation4 + $0x3e8] sm:$0xff]
          %v2158 = vld [vmem:[#allocation4 + $0x3f0] sm:$0xff]
          %v2159 = vld [vmem:[#allocation4 + $0x3f8] sm:$0xff]
          %v2160 = vld [vmem:[%s8] sm:$0xff]
          %v2162 = vlaneseq
          %v2163 = vshrl.u32 %v2162, 7
          %v2164 = vsub.s32 0, %v2163
          %v2165 = vrot.slane %v2160, %v2164
          %v2166 = vlaneseq
          %v2167 = vshrl.u32 %v2166, 7
          %v2168 = vsub.s32 1, %v2167
          %v2169 = vrot.slane %v2160, %v2168
          %v2170 = vlaneseq
          %v2171 = vshrl.u32 %v2170, 7
          %v2172 = vsub.s32 2, %v2171
          %v2173 = vrot.slane %v2160, %v2172
          %v2174 = vlaneseq
          %v2175 = vshrl.u32 %v2174, 7
          %v2176 = vsub.s32 3, %v2175
          %v2177 = vrot.slane %v2160, %v2176
          %v2178 = vlaneseq
          %v2179 = vshrl.u32 %v2178, 7
          %v2180 = vsub.s32 4, %v2179
          %v2181 = vrot.slane %v2160, %v2180
          %v2182 = vlaneseq
          %v2183 = vshrl.u32 %v2182, 7
          %v2184 = vsub.s32 5, %v2183
          %v2185 = vrot.slane %v2160, %v2184
          %v2186 = vlaneseq
          %v2187 = vshrl.u32 %v2186, 7
          %v2188 = vsub.s32 6, %v2187
          %v2189 = vrot.slane %v2160, %v2188
          %v2190 = vlaneseq
          %v2191 = vshrl.u32 %v2190, 7
          %v2192 = vsub.s32 7, %v2191
          %v2193 = vrot.slane %v2160, %v2192
          %v2330 = vunpack.c.l.b16 %v2032
          %v2331 = vunpack.c.h.b16 %v2032
          %v2332 = vunpack.c.l.b16 %v2033
          %v2333 = vunpack.c.h.b16 %v2033
          %v2334 = vunpack.c.l.b16 %v2034
          %v2335 = vunpack.c.h.b16 %v2034
          %v2336 = vunpack.c.l.b16 %v2035
          %v2337 = vunpack.c.h.b16 %v2035
          %v2338 = vunpack.c.l.b16 %v2036
          %v2339 = vunpack.c.h.b16 %v2036
          %v2340 = vunpack.c.l.b16 %v2037
          %v2341 = vunpack.c.h.b16 %v2037
          %v2342 = vunpack.c.l.b16 %v2038
          %v2343 = vunpack.c.h.b16 %v2038
          %v2344 = vunpack.c.l.b16 %v2039
          %v2345 = vunpack.c.h.b16 %v2039
          %v2346 = vunpack.c.l.b16 %v2040
          %v2347 = vunpack.c.h.b16 %v2040
          %v2348 = vunpack.c.l.b16 %v2041
          %v2349 = vunpack.c.h.b16 %v2041
          %v2350 = vunpack.c.l.b16 %v2042
          %v2351 = vunpack.c.h.b16 %v2042
          %v2352 = vunpack.c.l.b16 %v2043
          %v2353 = vunpack.c.h.b16 %v2043
          %v2354 = vunpack.c.l.b16 %v2044
          %v2355 = vunpack.c.h.b16 %v2044
          %v2356 = vunpack.c.l.b16 %v2045
          %v2357 = vunpack.c.h.b16 %v2045
          %v2358 = vunpack.c.l.b16 %v2046
          %v2359 = vunpack.c.h.b16 %v2046
          %v2360 = vunpack.c.l.b16 %v2047
          %v2361 = vunpack.c.h.b16 %v2047
          %v2362 = vunpack.c.l.b16 %v2048
          %v2363 = vunpack.c.h.b16 %v2048
          %v2364 = vunpack.c.l.b16 %v2049
          %v2365 = vunpack.c.h.b16 %v2049
          %v2366 = vunpack.c.l.b16 %v2050
          %v2367 = vunpack.c.h.b16 %v2050
          %v2368 = vunpack.c.l.b16 %v2051
          %v2369 = vunpack.c.h.b16 %v2051
          %v2370 = vunpack.c.l.b16 %v2052
          %v2371 = vunpack.c.h.b16 %v2052
          %v2372 = vunpack.c.l.b16 %v2053
          %v2373 = vunpack.c.h.b16 %v2053
          %v2374 = vunpack.c.l.b16 %v2054
          %v2375 = vunpack.c.h.b16 %v2054
          %v2376 = vunpack.c.l.b16 %v2055
          %v2377 = vunpack.c.h.b16 %v2055
          %v2378 = vunpack.c.l.b16 %v2056
          %v2379 = vunpack.c.h.b16 %v2056
          %v2380 = vunpack.c.l.b16 %v2057
          %v2381 = vunpack.c.h.b16 %v2057
          %v2382 = vunpack.c.l.b16 %v2058
          %v2383 = vunpack.c.h.b16 %v2058
          %v2384 = vunpack.c.l.b16 %v2059
          %v2385 = vunpack.c.h.b16 %v2059
          %v2386 = vunpack.c.l.b16 %v2060
          %v2387 = vunpack.c.h.b16 %v2060
          %v2388 = vunpack.c.l.b16 %v2061
          %v2389 = vunpack.c.h.b16 %v2061
          %v2390 = vunpack.c.l.b16 %v2062
          %v2391 = vunpack.c.h.b16 %v2062
          %v2392 = vunpack.c.l.b16 %v2063
          %v2393 = vunpack.c.h.b16 %v2063
          %v2394 = vunpack.c.l.b16 %v2064
          %v2395 = vunpack.c.h.b16 %v2064
          %v2396 = vunpack.c.l.b16 %v2065
          %v2397 = vunpack.c.h.b16 %v2065
          %v2398 = vunpack.c.l.b16 %v2066
          %v2399 = vunpack.c.h.b16 %v2066
          %v2400 = vunpack.c.l.b16 %v2067
          %v2401 = vunpack.c.h.b16 %v2067
          %v2402 = vunpack.c.l.b16 %v2068
          %v2403 = vunpack.c.h.b16 %v2068
          %v2404 = vunpack.c.l.b16 %v2069
          %v2405 = vunpack.c.h.b16 %v2069
          %v2406 = vunpack.c.l.b16 %v2070
          %v2407 = vunpack.c.h.b16 %v2070
          %v2408 = vunpack.c.l.b16 %v2071
          %v2409 = vunpack.c.h.b16 %v2071
          %v2410 = vunpack.c.l.b16 %v2072
          %v2411 = vunpack.c.h.b16 %v2072
          %v2412 = vunpack.c.l.b16 %v2073
          %v2413 = vunpack.c.h.b16 %v2073
          %v2414 = vunpack.c.l.b16 %v2074
          %v2415 = vunpack.c.h.b16 %v2074
          %v2416 = vunpack.c.l.b16 %v2075
          %v2417 = vunpack.c.h.b16 %v2075
          %v2418 = vunpack.c.l.b16 %v2076
          %v2419 = vunpack.c.h.b16 %v2076
          %v2420 = vunpack.c.l.b16 %v2077
          %v2421 = vunpack.c.h.b16 %v2077
          %v2422 = vunpack.c.l.b16 %v2078
          %v2423 = vunpack.c.h.b16 %v2078
          %v2424 = vunpack.c.l.b16 %v2079
          %v2425 = vunpack.c.h.b16 %v2079
          %v2426 = vunpack.c.l.b16 %v2080
          %v2427 = vunpack.c.h.b16 %v2080
          %v2428 = vunpack.c.l.b16 %v2081
          %v2429 = vunpack.c.h.b16 %v2081
          %v2430 = vunpack.c.l.b16 %v2082
          %v2431 = vunpack.c.h.b16 %v2082
          %v2432 = vunpack.c.l.b16 %v2083
          %v2433 = vunpack.c.h.b16 %v2083
          %v2434 = vunpack.c.l.b16 %v2084
          %v2435 = vunpack.c.h.b16 %v2084
          %v2436 = vunpack.c.l.b16 %v2085
          %v2437 = vunpack.c.h.b16 %v2085
          %v2438 = vunpack.c.l.b16 %v2086
          %v2439 = vunpack.c.h.b16 %v2086
          %v2440 = vunpack.c.l.b16 %v2087
          %v2441 = vunpack.c.h.b16 %v2087
          %v2442 = vunpack.c.l.b16 %v2088
          %v2443 = vunpack.c.h.b16 %v2088
          %v2444 = vunpack.c.l.b16 %v2089
          %v2445 = vunpack.c.h.b16 %v2089
          %v2446 = vunpack.c.l.b16 %v2090
          %v2447 = vunpack.c.h.b16 %v2090
          %v2448 = vunpack.c.l.b16 %v2091
          %v2449 = vunpack.c.h.b16 %v2091
          %v2450 = vunpack.c.l.b16 %v2092
          %v2451 = vunpack.c.h.b16 %v2092
          %v2452 = vunpack.c.l.b16 %v2093
          %v2453 = vunpack.c.h.b16 %v2093
          %v2454 = vunpack.c.l.b16 %v2094
          %v2455 = vunpack.c.h.b16 %v2094
          %v2456 = vunpack.c.l.b16 %v2095
          %v2457 = vunpack.c.h.b16 %v2095
          %v2458 = vunpack.c.l.b16 %v2096
          %v2459 = vunpack.c.h.b16 %v2096
          %v2460 = vunpack.c.l.b16 %v2097
          %v2461 = vunpack.c.h.b16 %v2097
          %v2462 = vunpack.c.l.b16 %v2098
          %v2463 = vunpack.c.h.b16 %v2098
          %v2464 = vunpack.c.l.b16 %v2099
          %v2465 = vunpack.c.h.b16 %v2099
          %v2466 = vunpack.c.l.b16 %v2100
          %v2467 = vunpack.c.h.b16 %v2100
          %v2468 = vunpack.c.l.b16 %v2101
          %v2469 = vunpack.c.h.b16 %v2101
          %v2470 = vunpack.c.l.b16 %v2102
          %v2471 = vunpack.c.h.b16 %v2102
          %v2472 = vunpack.c.l.b16 %v2103
          %v2473 = vunpack.c.h.b16 %v2103
          %v2474 = vunpack.c.l.b16 %v2104
          %v2475 = vunpack.c.h.b16 %v2104
          %v2476 = vunpack.c.l.b16 %v2105
          %v2477 = vunpack.c.h.b16 %v2105
          %v2478 = vunpack.c.l.b16 %v2106
          %v2479 = vunpack.c.h.b16 %v2106
          %v2480 = vunpack.c.l.b16 %v2107
          %v2481 = vunpack.c.h.b16 %v2107
          %v2482 = vunpack.c.l.b16 %v2108
          %v2483 = vunpack.c.h.b16 %v2108
          %v2484 = vunpack.c.l.b16 %v2109
          %v2485 = vunpack.c.h.b16 %v2109
          %v2486 = vunpack.c.l.b16 %v2110
          %v2487 = vunpack.c.h.b16 %v2110
          %v2488 = vunpack.c.l.b16 %v2111
          %v2489 = vunpack.c.h.b16 %v2111
          %v2490 = vunpack.c.l.b16 %v2112
          %v2491 = vunpack.c.h.b16 %v2112
          %v2492 = vunpack.c.l.b16 %v2113
          %v2493 = vunpack.c.h.b16 %v2113
          %v2494 = vunpack.c.l.b16 %v2114
          %v2495 = vunpack.c.h.b16 %v2114
          %v2496 = vunpack.c.l.b16 %v2115
          %v2497 = vunpack.c.h.b16 %v2115
          %v2498 = vunpack.c.l.b16 %v2116
          %v2499 = vunpack.c.h.b16 %v2116
          %v2500 = vunpack.c.l.b16 %v2117
          %v2501 = vunpack.c.h.b16 %v2117
          %v2502 = vunpack.c.l.b16 %v2118
          %v2503 = vunpack.c.h.b16 %v2118
          %v2504 = vunpack.c.l.b16 %v2119
          %v2505 = vunpack.c.h.b16 %v2119
          %v2506 = vunpack.c.l.b16 %v2120
          %v2507 = vunpack.c.h.b16 %v2120
          %v2508 = vunpack.c.l.b16 %v2121
          %v2509 = vunpack.c.h.b16 %v2121
          %v2510 = vunpack.c.l.b16 %v2122
          %v2511 = vunpack.c.h.b16 %v2122
          %v2512 = vunpack.c.l.b16 %v2123
          %v2513 = vunpack.c.h.b16 %v2123
          %v2514 = vunpack.c.l.b16 %v2124
          %v2515 = vunpack.c.h.b16 %v2124
          %v2516 = vunpack.c.l.b16 %v2125
          %v2517 = vunpack.c.h.b16 %v2125
          %v2518 = vunpack.c.l.b16 %v2126
          %v2519 = vunpack.c.h.b16 %v2126
          %v2520 = vunpack.c.l.b16 %v2127
          %v2521 = vunpack.c.h.b16 %v2127
          %v2522 = vunpack.c.l.b16 %v2128
          %v2523 = vunpack.c.h.b16 %v2128
          %v2524 = vunpack.c.l.b16 %v2129
          %v2525 = vunpack.c.h.b16 %v2129
          %v2526 = vunpack.c.l.b16 %v2130
          %v2527 = vunpack.c.h.b16 %v2130
          %v2528 = vunpack.c.l.b16 %v2131
          %v2529 = vunpack.c.h.b16 %v2131
          %v2530 = vunpack.c.l.b16 %v2132
          %v2531 = vunpack.c.h.b16 %v2132
          %v2532 = vunpack.c.l.b16 %v2133
          %v2533 = vunpack.c.h.b16 %v2133
          %v2534 = vunpack.c.l.b16 %v2134
          %v2535 = vunpack.c.h.b16 %v2134
          %v2536 = vunpack.c.l.b16 %v2135
          %v2537 = vunpack.c.h.b16 %v2135
          %v2538 = vunpack.c.l.b16 %v2136
          %v2539 = vunpack.c.h.b16 %v2136
          %v2540 = vunpack.c.l.b16 %v2137
          %v2541 = vunpack.c.h.b16 %v2137
          %v2542 = vunpack.c.l.b16 %v2138
          %v2543 = vunpack.c.h.b16 %v2138
          %v2544 = vunpack.c.l.b16 %v2139
          %v2545 = vunpack.c.h.b16 %v2139
          %v2546 = vunpack.c.l.b16 %v2140
          %v2547 = vunpack.c.h.b16 %v2140
          %v2548 = vunpack.c.l.b16 %v2141
          %v2549 = vunpack.c.h.b16 %v2141
          %v2550 = vunpack.c.l.b16 %v2142
          %v2551 = vunpack.c.h.b16 %v2142
          %v2552 = vunpack.c.l.b16 %v2143
          %v2553 = vunpack.c.h.b16 %v2143
          %v2554 = vunpack.c.l.b16 %v2144
          %v2555 = vunpack.c.h.b16 %v2144
          %v2556 = vunpack.c.l.b16 %v2145
          %v2557 = vunpack.c.h.b16 %v2145
          %v2558 = vunpack.c.l.b16 %v2146
          %v2559 = vunpack.c.h.b16 %v2146
          %v2560 = vunpack.c.l.b16 %v2147
          %v2561 = vunpack.c.h.b16 %v2147
          %v2562 = vunpack.c.l.b16 %v2148
          %v2563 = vunpack.c.h.b16 %v2148
          %v2564 = vunpack.c.l.b16 %v2149
          %v2565 = vunpack.c.h.b16 %v2149
          %v2566 = vunpack.c.l.b16 %v2150
          %v2567 = vunpack.c.h.b16 %v2150
          %v2568 = vunpack.c.l.b16 %v2151
          %v2569 = vunpack.c.h.b16 %v2151
          %v2570 = vunpack.c.l.b16 %v2152
          %v2571 = vunpack.c.h.b16 %v2152
          %v2572 = vunpack.c.l.b16 %v2153
          %v2573 = vunpack.c.h.b16 %v2153
          %v2574 = vunpack.c.l.b16 %v2154
          %v2575 = vunpack.c.h.b16 %v2154
          %v2576 = vunpack.c.l.b16 %v2155
          %v2577 = vunpack.c.h.b16 %v2155
          %v2578 = vunpack.c.l.b16 %v2156
          %v2579 = vunpack.c.h.b16 %v2156
          %v2580 = vunpack.c.l.b16 %v2157
          %v2581 = vunpack.c.h.b16 %v2157
          %v2582 = vunpack.c.l.b16 %v2158
          %v2583 = vunpack.c.h.b16 %v2158
          %v2584 = vunpack.c.l.b16 %v2159
          %v2585 = vunpack.c.h.b16 %v2159
          %v2586 = vpack.c.b16 %v2338, %v2330
          %v2587 = vpack.c.b16 %v2339, %v2331
          %v2588 = vpack.c.b16 %v2340, %v2332
          %v2589 = vpack.c.b16 %v2341, %v2333
          %v2590 = vpack.c.b16 %v2342, %v2334
          %v2591 = vpack.c.b16 %v2343, %v2335
          %v2592 = vpack.c.b16 %v2344, %v2336
          %v2593 = vpack.c.b16 %v2345, %v2337
          %v2594 = vpack.c.b16 %v2354, %v2346
          %v2595 = vpack.c.b16 %v2355, %v2347
          %v2596 = vpack.c.b16 %v2356, %v2348
          %v2597 = vpack.c.b16 %v2357, %v2349
          %v2598 = vpack.c.b16 %v2358, %v2350
          %v2599 = vpack.c.b16 %v2359, %v2351
          %v2600 = vpack.c.b16 %v2360, %v2352
          %v2601 = vpack.c.b16 %v2361, %v2353
          %v2602 = vpack.c.b16 %v2370, %v2362
          %v2603 = vpack.c.b16 %v2371, %v2363
          %v2604 = vpack.c.b16 %v2372, %v2364
          %v2605 = vpack.c.b16 %v2373, %v2365
          %v2606 = vpack.c.b16 %v2374, %v2366
          %v2607 = vpack.c.b16 %v2375, %v2367
          %v2608 = vpack.c.b16 %v2376, %v2368
          %v2609 = vpack.c.b16 %v2377, %v2369
          %v2610 = vpack.c.b16 %v2386, %v2378
          %v2611 = vpack.c.b16 %v2387, %v2379
          %v2612 = vpack.c.b16 %v2388, %v2380
          %v2613 = vpack.c.b16 %v2389, %v2381
          %v2614 = vpack.c.b16 %v2390, %v2382
          %v2615 = vpack.c.b16 %v2391, %v2383
          %v2616 = vpack.c.b16 %v2392, %v2384
          %v2617 = vpack.c.b16 %v2393, %v2385
          %v2618 = vpack.c.b16 %v2402, %v2394
          %v2619 = vpack.c.b16 %v2403, %v2395
          %v2620 = vpack.c.b16 %v2404, %v2396
          %v2621 = vpack.c.b16 %v2405, %v2397
          %v2622 = vpack.c.b16 %v2406, %v2398
          %v2623 = vpack.c.b16 %v2407, %v2399
          %v2624 = vpack.c.b16 %v2408, %v2400
          %v2625 = vpack.c.b16 %v2409, %v2401
          %v2626 = vpack.c.b16 %v2418, %v2410
          %v2627 = vpack.c.b16 %v2419, %v2411
          %v2628 = vpack.c.b16 %v2420, %v2412
          %v2629 = vpack.c.b16 %v2421, %v2413
          %v2630 = vpack.c.b16 %v2422, %v2414
          %v2631 = vpack.c.b16 %v2423, %v2415
          %v2632 = vpack.c.b16 %v2424, %v2416
          %v2633 = vpack.c.b16 %v2425, %v2417
          %v2634 = vpack.c.b16 %v2434, %v2426
          %v2635 = vpack.c.b16 %v2435, %v2427
          %v2636 = vpack.c.b16 %v2436, %v2428
          %v2637 = vpack.c.b16 %v2437, %v2429
          %v2638 = vpack.c.b16 %v2438, %v2430
          %v2639 = vpack.c.b16 %v2439, %v2431
          %v2640 = vpack.c.b16 %v2440, %v2432
          %v2641 = vpack.c.b16 %v2441, %v2433
          %v2642 = vpack.c.b16 %v2450, %v2442
          %v2643 = vpack.c.b16 %v2451, %v2443
          %v2644 = vpack.c.b16 %v2452, %v2444
          %v2645 = vpack.c.b16 %v2453, %v2445
          %v2646 = vpack.c.b16 %v2454, %v2446
          %v2647 = vpack.c.b16 %v2455, %v2447
          %v2648 = vpack.c.b16 %v2456, %v2448
          %v2649 = vpack.c.b16 %v2457, %v2449
          %v2650 = vpack.c.b16 %v2466, %v2458
          %v2651 = vpack.c.b16 %v2467, %v2459
          %v2652 = vpack.c.b16 %v2468, %v2460
          %v2653 = vpack.c.b16 %v2469, %v2461
          %v2654 = vpack.c.b16 %v2470, %v2462
          %v2655 = vpack.c.b16 %v2471, %v2463
          %v2656 = vpack.c.b16 %v2472, %v2464
          %v2657 = vpack.c.b16 %v2473, %v2465
          %v2658 = vpack.c.b16 %v2482, %v2474
          %v2659 = vpack.c.b16 %v2483, %v2475
          %v2660 = vpack.c.b16 %v2484, %v2476
          %v2661 = vpack.c.b16 %v2485, %v2477
          %v2662 = vpack.c.b16 %v2486, %v2478
          %v2663 = vpack.c.b16 %v2487, %v2479
          %v2664 = vpack.c.b16 %v2488, %v2480
          %v2665 = vpack.c.b16 %v2489, %v2481
          %v2666 = vpack.c.b16 %v2498, %v2490
          %v2667 = vpack.c.b16 %v2499, %v2491
          %v2668 = vpack.c.b16 %v2500, %v2492
          %v2669 = vpack.c.b16 %v2501, %v2493
          %v2670 = vpack.c.b16 %v2502, %v2494
          %v2671 = vpack.c.b16 %v2503, %v2495
          %v2672 = vpack.c.b16 %v2504, %v2496
          %v2673 = vpack.c.b16 %v2505, %v2497
          %v2674 = vpack.c.b16 %v2514, %v2506
          %v2675 = vpack.c.b16 %v2515, %v2507
          %v2676 = vpack.c.b16 %v2516, %v2508
          %v2677 = vpack.c.b16 %v2517, %v2509
          %v2678 = vpack.c.b16 %v2518, %v2510
          %v2679 = vpack.c.b16 %v2519, %v2511
          %v2680 = vpack.c.b16 %v2520, %v2512
          %v2681 = vpack.c.b16 %v2521, %v2513
          %v2682 = vpack.c.b16 %v2530, %v2522
          %v2683 = vpack.c.b16 %v2531, %v2523
          %v2684 = vpack.c.b16 %v2532, %v2524
          %v2685 = vpack.c.b16 %v2533, %v2525
          %v2686 = vpack.c.b16 %v2534, %v2526
          %v2687 = vpack.c.b16 %v2535, %v2527
          %v2688 = vpack.c.b16 %v2536, %v2528
          %v2689 = vpack.c.b16 %v2537, %v2529
          %v2690 = vpack.c.b16 %v2546, %v2538
          %v2691 = vpack.c.b16 %v2547, %v2539
          %v2692 = vpack.c.b16 %v2548, %v2540
          %v2693 = vpack.c.b16 %v2549, %v2541
          %v2694 = vpack.c.b16 %v2550, %v2542
          %v2695 = vpack.c.b16 %v2551, %v2543
          %v2696 = vpack.c.b16 %v2552, %v2544
          %v2697 = vpack.c.b16 %v2553, %v2545
          %v2698 = vpack.c.b16 %v2562, %v2554
          %v2699 = vpack.c.b16 %v2563, %v2555
          %v2700 = vpack.c.b16 %v2564, %v2556
          %v2701 = vpack.c.b16 %v2565, %v2557
          %v2702 = vpack.c.b16 %v2566, %v2558
          %v2703 = vpack.c.b16 %v2567, %v2559
          %v2704 = vpack.c.b16 %v2568, %v2560
          %v2705 = vpack.c.b16 %v2569, %v2561
          %v2706 = vpack.c.b16 %v2578, %v2570
          %v2707 = vpack.c.b16 %v2579, %v2571
          %v2708 = vpack.c.b16 %v2580, %v2572
          %v2709 = vpack.c.b16 %v2581, %v2573
          %v2710 = vpack.c.b16 %v2582, %v2574
          %v2711 = vpack.c.b16 %v2583, %v2575
          %v2712 = vpack.c.b16 %v2584, %v2576
          %v2713 = vpack.c.b16 %v2585, %v2577
          %2842 = vmatprep.subr.bf16.mxu0 %v2587
          %2843 = vmatpush1.bf16.msra.mxu0 %v2586
          %2844 = vmatprep.subr.bf16.mxu0 %v2595
          %2845 = vmatpush1.bf16.msra.mxu0 %v2594
          %2846 = vmatprep.subr.bf16.mxu0 %v2603
          %2847 = vmatpush1.bf16.msra.mxu0 %v2602
          %2848 = vmatprep.subr.bf16.mxu0 %v2611
          %2849 = vmatpush1.bf16.msra.mxu0 %v2610
          %2850 = vmatprep.subr.bf16.mxu0 %v2619
          %2851 = vmatpush1.bf16.msra.mxu0 %v2618
          %2852 = vmatprep.subr.bf16.mxu0 %v2627
          %2853 = vmatpush1.bf16.msra.mxu0 %v2626
          %2854 = vmatprep.subr.bf16.mxu0 %v2635
          %2855 = vmatpush1.bf16.msra.mxu0 %v2634
          %2856 = vmatprep.subr.bf16.mxu0 %v2643
          %2857 = vmatpush1.bf16.msra.mxu0 %v2642
          %2858 = vmatprep.subr.bf16.mxu0 %v2651
          %2859 = vmatpush1.bf16.msra.mxu0 %v2650
          %2860 = vmatprep.subr.bf16.mxu0 %v2659
          %2861 = vmatpush1.bf16.msra.mxu0 %v2658
          %2862 = vmatprep.subr.bf16.mxu0 %v2667
          %2863 = vmatpush1.bf16.msra.mxu0 %v2666
          %2864 = vmatprep.subr.bf16.mxu0 %v2675
          %2865 = vmatpush1.bf16.msra.mxu0 %v2674
          %2866 = vmatprep.subr.bf16.mxu0 %v2683
          %2867 = vmatpush1.bf16.msra.mxu0 %v2682
          %2868 = vmatprep.subr.bf16.mxu0 %v2691
          %2869 = vmatpush1.bf16.msra.mxu0 %v2690
          %2870 = vmatprep.subr.bf16.mxu0 %v2699
          %2871 = vmatpush1.bf16.msra.mxu0 %v2698
          %2872 = vmatprep.subr.bf16.mxu0 %v2707
          %2873 = vmatpush1.bf16.msra.mxu0 %v2706
          %2874 = vmatprep.mubr.bf16.mxu0 %v2031
          %2875 = vmatmul.mubr.bf16.gmra.mrb[0].mxu0 %v2030
          %v2876 = vpop.f32.mrb[0].mxu0
          %v2877 = vadd.f32 %v2165, %v2876
          %v2878 = vpop.f32.mrb[0].mxu0
          %v2879 = vadd.f32 %v2169, %v2878
          %v2880 = vpop.f32.mrb[0].mxu0
          %v2881 = vpop.f32.mrb[0].mxu0
          %2882 = vdwg.mxu0
          %2883 = vmatprep.subr.bf16.mxu0 %v2589
          %2884 = vmatpush1.bf16.msra.mxu0 %v2588
          %2885 = vmatprep.subr.bf16.mxu0 %v2597
          %2886 = vmatpush1.bf16.msra.mxu0 %v2596
          %2887 = vmatprep.subr.bf16.mxu0 %v2605
          %2888 = vmatpush1.bf16.msra.mxu0 %v2604
          %2889 = vmatprep.subr.bf16.mxu0 %v2613
          %2890 = vmatpush1.bf16.msra.mxu0 %v2612
          %2891 = vmatprep.subr.bf16.mxu0 %v2621
          %2892 = vmatpush1.bf16.msra.mxu0 %v2620
          %2893 = vmatprep.subr.bf16.mxu0 %v2629
          %2894 = vmatpush1.bf16.msra.mxu0 %v2628
          %2895 = vmatprep.subr.bf16.mxu0 %v2637
          %2896 = vmatpush1.bf16.msra.mxu0 %v2636
          %2897 = vmatprep.subr.bf16.mxu0 %v2645
          %2898 = vmatpush1.bf16.msra.mxu0 %v2644
          %2899 = vmatprep.subr.bf16.mxu0 %v2653
          %2900 = vmatpush1.bf16.msra.mxu0 %v2652
          %2901 = vmatprep.subr.bf16.mxu0 %v2661
          %2902 = vmatpush1.bf16.msra.mxu0 %v2660
          %2903 = vmatprep.subr.bf16.mxu0 %v2669
          %2904 = vmatpush1.bf16.msra.mxu0 %v2668
          %2905 = vmatprep.subr.bf16.mxu0 %v2677
          %2906 = vmatpush1.bf16.msra.mxu0 %v2676
          %2907 = vmatprep.subr.bf16.mxu0 %v2685
          %2908 = vmatpush1.bf16.msra.mxu0 %v2684
          %2909 = vmatprep.subr.bf16.mxu0 %v2693
          %2910 = vmatpush1.bf16.msra.mxu0 %v2692
          %2911 = vmatprep.subr.bf16.mxu0 %v2701
          %2912 = vmatpush1.bf16.msra.mxu0 %v2700
          %2913 = vmatprep.subr.bf16.mxu0 %v2709
          %2914 = vmatpush1.bf16.msra.mxu0 %v2708
          %2915 = vmatprep.mubr.bf16.mxu0 %v2031
          %2916 = vmatmul.mubr.bf16.gmra.mrb[0].mxu0 %v2030
          %v2917 = vpop.f32.mrb[0].mxu0
          %v2918 = vadd.f32 %v2173, %v2917
          %v2919 = vpop.f32.mrb[0].mxu0
          %v2920 = vadd.f32 %v2177, %v2919
          %v2921 = vpop.f32.mrb[0].mxu0
          %v2922 = vpop.f32.mrb[0].mxu0
          %2923 = vdwg.mxu0
          %2924 = vmatprep.subr.bf16.mxu0 %v2591
          %2925 = vmatpush1.bf16.msra.mxu0 %v2590
          %2926 = vmatprep.subr.bf16.mxu0 %v2599
          %2927 = vmatpush1.bf16.msra.mxu0 %v2598
          %2928 = vmatprep.subr.bf16.mxu0 %v2607
          %2929 = vmatpush1.bf16.msra.mxu0 %v2606
          %2930 = vmatprep.subr.bf16.mxu0 %v2615
          %2931 = vmatpush1.bf16.msra.mxu0 %v2614
          %2932 = vmatprep.subr.bf16.mxu0 %v2623
          %2933 = vmatpush1.bf16.msra.mxu0 %v2622
          %2934 = vmatprep.subr.bf16.mxu0 %v2631
          %2935 = vmatpush1.bf16.msra.mxu0 %v2630
          %2936 = vmatprep.subr.bf16.mxu0 %v2639
          %2937 = vmatpush1.bf16.msra.mxu0 %v2638
          %2938 = vmatprep.subr.bf16.mxu0 %v2647
          %2939 = vmatpush1.bf16.msra.mxu0 %v2646
          %2940 = vmatprep.subr.bf16.mxu0 %v2655
          %2941 = vmatpush1.bf16.msra.mxu0 %v2654
          %2942 = vmatprep.subr.bf16.mxu0 %v2663
          %2943 = vmatpush1.bf16.msra.mxu0 %v2662
          %2944 = vmatprep.subr.bf16.mxu0 %v2671
          %2945 = vmatpush1.bf16.msra.mxu0 %v2670
          %2946 = vmatprep.subr.bf16.mxu0 %v2679
          %2947 = vmatpush1.bf16.msra.mxu0 %v2678
          %2948 = vmatprep.subr.bf16.mxu0 %v2687
          %2949 = vmatpush1.bf16.msra.mxu0 %v2686
          %2950 = vmatprep.subr.bf16.mxu0 %v2695
          %2951 = vmatpush1.bf16.msra.mxu0 %v2694
          %2952 = vmatprep.subr.bf16.mxu0 %v2703
          %2953 = vmatpush1.bf16.msra.mxu0 %v2702
          %2954 = vmatprep.subr.bf16.mxu0 %v2711
          %2955 = vmatpush1.bf16.msra.mxu0 %v2710
          %2956 = vmatprep.mubr.bf16.mxu0 %v2031
          %2957 = vmatmul.mubr.bf16.gmra.mrb[0].mxu0 %v2030
          %v2958 = vpop.f32.mrb[0].mxu0
          %v2959 = vadd.f32 %v2181, %v2958
          %v2960 = vpop.f32.mrb[0].mxu0
          %v2961 = vadd.f32 %v2185, %v2960
          %v2962 = vpop.f32.mrb[0].mxu0
          %v2963 = vpop.f32.mrb[0].mxu0
          %2964 = vdwg.mxu0
          %2965 = vmatprep.subr.bf16.mxu0 %v2593
          %2966 = vmatpush1.bf16.msra.mxu0 %v2592
          %2967 = vmatprep.subr.bf16.mxu0 %v2601
          %2968 = vmatpush1.bf16.msra.mxu0 %v2600
          %2969 = vmatprep.subr.bf16.mxu0 %v2609
          %2970 = vmatpush1.bf16.msra.mxu0 %v2608
          %2971 = vmatprep.subr.bf16.mxu0 %v2617
          %2972 = vmatpush1.bf16.msra.mxu0 %v2616
          %2973 = vmatprep.subr.bf16.mxu0 %v2625
          %2974 = vmatpush1.bf16.msra.mxu0 %v2624
          %2975 = vmatprep.subr.bf16.mxu0 %v2633
          %2976 = vmatpush1.bf16.msra.mxu0 %v2632
          %2977 = vmatprep.subr.bf16.mxu0 %v2641
          %2978 = vmatpush1.bf16.msra.mxu0 %v2640
          %2979 = vmatprep.subr.bf16.mxu0 %v2649
          %2980 = vmatpush1.bf16.msra.mxu0 %v2648
          %2981 = vmatprep.subr.bf16.mxu0 %v2657
          %2982 = vmatpush1.bf16.msra.mxu0 %v2656
          %2983 = vmatprep.subr.bf16.mxu0 %v2665
          %2984 = vmatpush1.bf16.msra.mxu0 %v2664
          %2985 = vmatprep.subr.bf16.mxu0 %v2673
          %2986 = vmatpush1.bf16.msra.mxu0 %v2672
          %2987 = vmatprep.subr.bf16.mxu0 %v2681
          %2988 = vmatpush1.bf16.msra.mxu0 %v2680
          %2989 = vmatprep.subr.bf16.mxu0 %v2689
          %2990 = vmatpush1.bf16.msra.mxu0 %v2688
          %2991 = vmatprep.subr.bf16.mxu0 %v2697
          %2992 = vmatpush1.bf16.msra.mxu0 %v2696
          %2993 = vmatprep.subr.bf16.mxu0 %v2705
          %2994 = vmatpush1.bf16.msra.mxu0 %v2704
          %2995 = vmatprep.subr.bf16.mxu0 %v2713
          %2996 = vmatpush1.bf16.msra.mxu0 %v2712
          %2997 = vmatprep.mubr.bf16.mxu0 %v2031
          %2998 = vmatmul.mubr.bf16.gmra.mrb[0].mxu0 %v2030
          %v2999 = vpop.f32.mrb[0].mxu0
          %v3000 = vadd.f32 %v2189, %v2999
          %v3001 = vpop.f32.mrb[0].mxu0
          %v3002 = vadd.f32 %v2193, %v3001
          %v3003 = vpop.f32.mrb[0].mxu0
          %v3004 = vpop.f32.mrb[0].mxu0
          %3005 = vdwg.mxu0
          %v3014 = vcombine.low %v2877, %v2879
          %v3015 = vcombine.low %v2918, %v2920
          %v3017 = vunpack.c.l.s4 1983009808
          %v3018 = vunpack.c.0.s8 %v3017
          %v3019 = vlaneseq
          %v3020 = vshrl.u32 %v3019, 7
          %v3021 = vsub.s32 %v3018, %v3020
          %v3022 = vrot.slane %v3014, %v3021
          %v3024 = vunpack.c.l.s4 1983009808
          %v3025 = vunpack.c.0.s8 %v3024
          %v3026 = vlaneseq
          %v3027 = vshrl.u32 %v3026, 7
          %v3028 = vsub.s32 %v3025, %v3027
          %v3029 = vrot.slane %v3015, %v3028
          %v3030 = vcombine.low %v3022, %v3029
          %v3031 = vcombine.low %v2959, %v2961
          %v3032 = vcombine.low %v3000, %v3002
          %v3034 = vunpack.c.l.s4 1983009808
          %v3035 = vunpack.c.0.s8 %v3034
          %v3036 = vlaneseq
          %v3037 = vshrl.u32 %v3036, 7
          %v3038 = vsub.s32 %v3035, %v3037
          %v3039 = vrot.slane %v3031, %v3038
          %v3041 = vunpack.c.l.s4 1983009808
          %v3042 = vunpack.c.0.s8 %v3041
          %v3043 = vlaneseq
          %v3044 = vshrl.u32 %v3043, 7
          %v3045 = vsub.s32 %v3042, %v3044
          %v3046 = vrot.slane %v3032, %v3045
          %v3047 = vcombine.low %v3039, %v3046
          %3050 = vst [vmem:[#allocation7] sm:$0xff] %v3030
          %3051 = vst [vmem:[#allocation7 + $0x8] sm:$0xff] %v3047
        $region106: #{tpu_custom_call.1} parent=89 // pred_fallthru
          _
        // Predicated region
        $region107: #{tpu_custom_call.1} parent=89 // pred_check
          %p3052 = pneg %p248
        $region108: #{tpu_custom_call.1} parent=89 // pred_check_branch
          %3054 = sbr.rel (%p3052) target = $region110
        $region109: #{tpu_custom_call.1} parent=89 // pred_region
          %s3056 = ssub.s32 256, 256
          %3057 = vsyncadd [#allocation6], %s3056
          %s3058 = smul.addr %s26, 8
          %s3059 = smul.addr %s3058, 32
          %s3060 = scalar_lea.hbm %s9, %s3059
          %s3062 = sshll.u32 [#allocation7], 4
          %s3063 = int_to_ptr.vmem [resolvable:$true] %s3062
          %3065 = dma.vmem_to_hbm [thread:$0]  %s3063, 256, %s3060, [#allocation6]
        $region110: #{tpu_custom_call.1} parent=89 // pred_fallthru
          _
        // Predicated region
        $region111: #{tpu_custom_call.1} parent=89 // pred_check
          %p3066 = pneg %p248
        $region112: #{tpu_custom_call.1} parent=89 // pred_check_branch
          %3068 = sbr.rel (%p3066) target = $region114
        $region113: #{tpu_custom_call.1} parent=89 // pred_region
          %3069 = dma.done [#allocation6], 256
        $region114: #{tpu_custom_call.1} parent=89 // pred_fallthru
          _
      $region90: #{tpu_custom_call.1} parent=5 // pred_fallthru
        _
      %p3070 = scmp.le.s32.totalorder 2, %s17
      // Predicated region
      $region115: #{tpu_custom_call.1} parent=5 // pred_check
        %p3071 = pneg %p3070
      $region116: #{tpu_custom_call.1} parent=5 // pred_check_branch
        %3073 = sbr.rel (%p3071) target = $region118
      $region117: #{tpu_custom_call.1} parent=5 // pred_region
        %s3074 = ssub.s32 %s17, 2
      $region118: #{tpu_custom_call.1} parent=5 // pred_fallthru
        _
    $region6: #{tpu_custom_call.1} parent=1 // loop_footer
      %s21 = sadd.s32 1, %s17
    $region7: #{tpu_custom_call.1} parent=1 // loop_footer_branch
      %16 = sbr.rel target = $region3
    $region8: #{tpu_custom_call.1} parent=1 // loop_exit
      _
    %3075 = vsyncpa [#allocation5], 1
    %s3076 = scalar_lea.sflag [#allocation5], 1
    %3077 = vsyncpa %s3076, 1
    %3078 = vsyncpa [#allocation6], 1
    %s3079 = scalar_lea.sflag [#allocation6], 1
    %3080 = vsyncpa %s3079, 1

</llo_original>
